<compile_context>
chip_gen: v6e
topology: v6e:2x2x1
jax: 0.10.0
libtpu: 0.0.40
codegen_flags: <defaults>
</compile_context>

<pallas_src>
import functools
import math

import jax
import jax.numpy as jnp
from jax import lax
from jax.experimental import pallas as pl
from jax.experimental.pallas import tpu as pltpu


BBLK = 8  # batch rows per grid step (fills the 8 sublanes)


def _layer_norm(x, gamma, beta, eps=1e-5):
    mu = jnp.mean(x, axis=-1, keepdims=True)
    var = jnp.mean((x - mu) ** 2, axis=-1, keepdims=True)
    return (x - mu) * lax.rsqrt(var + eps) * gamma + beta


def _encoder_last_kernel(x_ref, bias_ref,
                         wq_ref, wkv_ref, pool_ref, wo_ref, w1_ref, w2_ref,
                         vecs_ref, out_ref, *, hidden, dff, nhead):
    """Post-norm TransformerEncoderLayer (relu FFN), last query position only,
    for a block of BBLK batch rows."""
    H = hidden
    x = x_ref[...]                                   # (BBLK, S, H) bf16
    bblk, seq, _ = x.shape

    # Packed bias / gamma / beta rows (f32), sliced from one small table.
    bq  = vecs_ref[0:1, :H]                          # W_q bias (scale pre-folded)
    bkv = vecs_ref[1:2, :2 * H]
    bo  = vecs_ref[2:3, :H]
    b1  = vecs_ref[3:4, :dff]
    b2  = vecs_ref[4:5, :H]
    g1  = vecs_ref[5:6, :H]
    be1 = vecs_ref[6:7, :H]
    g2  = vecs_ref[7:8, :H]
    be2 = vecs_ref[8:9, :H]

    x2d = x.reshape(bblk * seq, H)                   # bf16, M = BBLK*S
    x_last_bf = x[:, seq - 1, :]                     # (BBLK, H) bf16 query rows
    x_last = x_last_bf.astype(jnp.float32)           # residual path in f32

    # K/V projection for all positions of all batch rows in the block.
    kv = jnp.dot(x2d, wkv_ref[...],
                 preferred_element_type=jnp.float32) + bkv       # (BBLK*S, 2H)
    kv = kv.reshape(bblk, seq, 2 * H)
    k = kv[:, :, :H]                                             # (BBLK, S, H) f32
    v = kv[:, :, H:]

    # Q only for the last position (1/sqrt(head_dim) folded into wq/bq).
    q = jnp.dot(x_last_bf, wq_ref[...],
                preferred_element_type=jnp.float32) + bq         # (BBLK, H)

    # Heads-batched scores: scores[b, s, h] = sum_{d in head h} q[b,d]*k[b,s,d]
    qk = (k * q[:, None, :]).astype(jnp.bfloat16)                # (BBLK, S, H)
    scores = jnp.dot(qk.reshape(bblk * seq, H), pool_ref[...],
                     preferred_element_type=jnp.float32)         # (BBLK*S, nhead)
    scores = scores.reshape(bblk, seq, nhead) + bias_ref[...]    # key-pad bias

    m = jnp.max(scores, axis=1, keepdims=True)                   # (BBLK, 1, nhead)
    p = jnp.exp(scores - m)
    l = jnp.sum(p, axis=1, keepdims=True)
    p = p * pl.reciprocal(l, approx=True)                        # softmax over keys

    # Expand per-head probs back over H lanes and weight V:  p_full = p @ pool.T
    p_full = lax.dot_general(
        p.astype(jnp.bfloat16).reshape(bblk * seq, nhead),
        pool_ref[...], (((1,), (1,)), ((), ())),
        preferred_element_type=jnp.float32)                      # (BBLK*S, H)
    p_full = p_full.reshape(bblk, seq, H)
    ctx = jnp.sum(p_full * v, axis=1)                            # (BBLK, H)

    attn = jnp.dot(ctx.astype(jnp.bfloat16), wo_ref[...],
                   preferred_element_type=jnp.float32) + bo      # (BBLK, H)
    x1 = _layer_norm(x_last + attn, g1, be1)

    h = jnp.dot(x1.astype(jnp.bfloat16), w1_ref[...],
                preferred_element_type=jnp.float32) + b1         # (BBLK, dff)
    h = jnp.maximum(h, 0.0)
    ff = jnp.dot(h.astype(jnp.bfloat16), w2_ref[...],
                 preferred_element_type=jnp.float32) + b2        # (BBLK, H)
    x2 = _layer_norm(x1 + ff, g2, be2)

    out_ref[...] = x2.astype(out_ref.dtype)


def _vmem_capacity_bytes():
    try:
        info = pltpu.get_tpu_info()
        for attr in ("vmem_capacity_bytes", "vmem_bytes", "vmem_size_bytes"):
            v = getattr(info, attr, None)
            if v:
                return int(v)
    except Exception:
        pass
    return 64 * 2**20  # conservative: v7x per-TensorCore capacity


def transformer_encoder_last(x, attn_mask, p):
    """Apply the encoder layer to x (N, S, H) bf16; return position S-1: (N, H) f32."""
    total, S, H = x.shape
    dff = p["w1t"].shape[1]
    nhead = p["nhead"]
    lmax = p["vecs"].shape[1]

    # Additive key-padding bias, precomputed on host: 0 for tokens, -1e30 for pad.
    bias = jnp.where(attn_mask == 0, jnp.float32(-1e30), jnp.float32(0.0))
    bias = bias.reshape(total, S, 1)

    # Pad the (fused) batch to a multiple of BBLK; padded rows see zero
    # activations and an all-zero bias (finite, discarded afterwards).
    pad = (-total) % BBLK
    if pad:
        x = jnp.pad(x, ((0, pad), (0, 0), (0, 0)))
        bias = jnp.pad(bias, ((0, pad), (0, 0), (0, 0)))
    n_padded = total + pad

    kernel = functools.partial(_encoder_last_kernel, hidden=H, dff=dff, nhead=nhead)

    def const(shape):
        # Weights / packed vectors: constant block index -> single-buffered VMEM.
        return pl.BlockSpec(shape, lambda b: (0,) * len(shape),
                            pipeline_mode=pl.Buffered(1))

    grid_spec = pltpu.PrefetchScalarGridSpec(
        num_scalar_prefetch=0,
        grid=(n_padded // BBLK,),
        in_specs=[
            pl.BlockSpec((BBLK, S, H), lambda b: (b, 0, 0)),   # activations (bf16)
            pl.BlockSpec((BBLK, S, 1), lambda b: (b, 0, 0)),   # key-padding bias
            const((H, H)),            # W_q (scaled, bf16)
            const((H, 2 * H)),        # W_kv (bf16)
            const((H, nhead)),        # head-pooling matrix (bf16)
            const((H, H)),            # out_proj (bf16)
            const((H, dff)),          # linear1 (bf16)
            const((dff, H)),          # linear2 (bf16)
            const((9, lmax)),         # packed biases / layer-norm params (f32)
        ],
        out_specs=pl.BlockSpec((BBLK, H), lambda b: (b, 0)),
    )

    # VMEM budget: bf16 weights (single-buffered) + packed vector table
    # + double-buffered per-block activation/bias/output blocks + compute temps,
    # with headroom, capped at ~80% of this generation's per-core VMEM.
    weight_bytes = 2 * (H * H + H * 2 * H + H * nhead + H * H + H * dff + dff * H)
    vec_bytes = 4 * 16 * lmax
    io_bytes = 2 * (BBLK * S * H * 2 + BBLK * S * 4 + BBLK * H * 4)
    tmp_bytes = 4 * BBLK * S * (6 * H + 2 * nhead)
    need = weight_bytes + vec_bytes + io_bytes + tmp_bytes
    vmem_limit = int(min(int(0.8 * _vmem_capacity_bytes()),
                         max(32 * 2**20, 4 * need)))

    out = pl.pallas_call(
        kernel,
        out_shape=jax.ShapeDtypeStruct((n_padded, H), jnp.float32),
        grid_spec=grid_spec,
        compiler_params=pltpu.CompilerParams(
            dimension_semantics=("parallel",),      # shard batch blocks over TCs
            vmem_limit_bytes=vmem_limit,
        ),
    )(x, bias, p["wqt"], p["wkvt"], p["head_pool"],
      p["wot"], p["w1t"], p["w2t"], p["vecs"])
    return out[:total]


def custom_model_last_forward(h1, h2, mask1, mask2, score_labels, params):
    """h1/h2: last hidden states from the (untranslatable) PEFT model, (B, S, H)."""
    B = h1.shape[0]
    # Fuse both encoder passes into one pallas_call; concat done in bf16 so the
    # extra HBM round-trip is half-width.
    x = jnp.concatenate([h1.astype(jnp.bfloat16), h2.astype(jnp.bfloat16)], axis=0)
    mask = jnp.concatenate([mask1, mask2], axis=0)
    pooled = transformer_encoder_last(x, mask, params)        # (2B, H) f32
    pooled1, pooled2 = pooled[:B], pooled[B:]

    # Cosine similarity + MSE in plain JAX (tiny elementwise reduction).
    n1 = jnp.sqrt(jnp.sum(pooled1 * pooled1, axis=-1, keepdims=True))
    n2 = jnp.sqrt(jnp.sum(pooled2 * pooled2, axis=-1, keepdims=True))
    e1 = pooled1 / jnp.maximum(n1, 1e-12)                     # F.normalize eps=1e-12
    e2 = pooled2 / jnp.maximum(n2, 1e-12)
    dot = jnp.sum(e1 * e2, axis=-1)
    m1 = jnp.sqrt(jnp.sum(e1 * e1, axis=-1))
    m2 = jnp.sqrt(jnp.sum(e2 * e2, axis=-1))
    similarity = dot / jnp.maximum(m1 * m2, 1e-8)             # cosine_similarity eps
    loss = jnp.mean((similarity - score_labels) ** 2)         # nn.MSELoss (mean)
    return similarity, loss


def init_params(key, hidden, dff, nhead):
    ks = jax.random.split(key, 8)
    s = 0.05
    hd = hidden // nhead
    scale = 1.0 / math.sqrt(hd)
    # torch layouts: in_proj_weight (3H, H) rows [q; k; v]; out_proj (H, H);
    # linear1 (dff, H); linear2 (H, dff).
    wqkv = jax.random.normal(ks[0], (3 * hidden, hidden), jnp.float32) * s
    wo = jax.random.normal(ks[1], (hidden, hidden), jnp.float32) * s
    w1 = jax.random.normal(ks[2], (dff, hidden), jnp.float32) * s
    w2 = jax.random.normal(ks[3], (hidden, dff), jnp.float32) * s
    bqkv = jax.random.normal(ks[4], (3 * hidden,), jnp.float32) * s
    bo = jax.random.normal(ks[5], (hidden,), jnp.float32) * s
    b1 = jax.random.normal(ks[6], (dff,), jnp.float32) * s
    b2 = jax.random.normal(ks[7], (hidden,), jnp.float32) * s

    # Block-diagonal head pooling matrix: pool[d, h] = 1 iff lane d belongs to
    # head h.  0/1 values, exact in bf16.
    head_pool = (jnp.arange(hidden)[:, None] // hd
                 == jnp.arange(nhead)[None, :]).astype(jnp.bfloat16)

    # Pack all bias / gamma / beta vectors into one small f32 table.
    lmax = max(2 * hidden, dff)

    def row(v):
        return jnp.pad(v.astype(jnp.float32), (0, lmax - v.shape[0]))

    vecs = jnp.stack([
        row(bqkv[:hidden] * scale),              # 0: b_q (scale folded)
        row(bqkv[hidden:]),                      # 1: b_kv
        row(bo),                                 # 2: out_proj bias
        row(b1),                                 # 3: linear1 bias
        row(b2),                                 # 4: linear2 bias
        row(jnp.ones((hidden,), jnp.float32)),   # 5: norm1 gamma
        row(jnp.zeros((hidden,), jnp.float32)),  # 6: norm1 beta
        row(jnp.ones((hidden,), jnp.float32)),   # 7: norm2 gamma
        row(jnp.zeros((hidden,), jnp.float32)),  # 8: norm2 beta
    ], axis=0)                                   # (9, lmax) f32

    return {
        "nhead": nhead,
        "wqt": (wqkv[:hidden].T * scale).astype(jnp.bfloat16),   # (H, H), scaled
        "wkvt": wqkv[hidden:].T.astype(jnp.bfloat16),            # (H, 2H)
        "head_pool": head_pool,                                  # (H, nhead) bf16
        "wot": wo.T.astype(jnp.bfloat16),                        # (H, H)
        "w1t": w1.T.astype(jnp.bfloat16),                        # (H, dff)
        "w2t": w2.T.astype(jnp.bfloat16),                        # (dff, H)
        "vecs": vecs,                                            # (9, lmax) f32
    }


if __name__ == "__main__":
    B, S, H, NHEAD, DFF = 2, 8, 32, 8, 64  # small synthetic shapes (H % NHEAD == 0)
    key = jax.random.PRNGKey(0)
    k_h1, k_h2, k_lab, k_par = jax.random.split(key, 4)

    # "last hidden states" from the base LLM, taken as inputs
    h1 = jax.random.normal(k_h1, (B, S, H), jnp.float32)
    h2 = jax.random.normal(k_h2, (B, S, H), jnp.float32)
    # attention masks (1 = token, 0 = pad)
    mask1 = jnp.array([[1] * S, [1] * (S - 3) + [0] * 3], dtype=jnp.int32)
    mask2 = jnp.array([[1] * (S - 2) + [0] * 2, [1] * S], dtype=jnp.int32)
    score_labels = jax.random.uniform(k_lab, (B,), jnp.float32)

    params = init_params(k_par, H, DFF, NHEAD)

    similarity, loss = custom_model_last_forward(h1, h2, mask1, mask2,
                                                 score_labels, params)
    jax.block_until_ready((similarity, loss))
    assert similarity.shape == (B,) and loss.shape == ()
    print("KERNEL_OK")
</pallas_src>

<mosaic_0001>
module attributes {stable_mosaic.version = 11 : i64} {
  func.func @_encoder_last_kernel(%arg0: i32, %arg1: memref<8x8x32xbf16, #tpu.memory_space<vmem>>, %arg2: memref<8x8x1xf32, #tpu.memory_space<vmem>>, %arg3: memref<32x32xbf16, #tpu.memory_space<vmem>>, %arg4: memref<32x64xbf16, #tpu.memory_space<vmem>>, %arg5: memref<32x8xbf16, #tpu.memory_space<vmem>>, %arg6: memref<32x32xbf16, #tpu.memory_space<vmem>>, %arg7: memref<32x64xbf16, #tpu.memory_space<vmem>>, %arg8: memref<64x32xbf16, #tpu.memory_space<vmem>>, %arg9: memref<9x64xf32, #tpu.memory_space<vmem>>, %arg10: memref<8x32xf32, #tpu.memory_space<vmem>>) attributes {dimension_semantics = [#tpu.dimension_semantics<parallel>], iteration_bounds = array<i64: 1>, scalar_prefetch = 0 : i64, scratch_operands = 0 : i64, tpu.core_type = #tpu.core_type<tc>, window_params = [{transform_indices = @transform_0, window_bounds = array<i64: 8, 8, 32>}, {transform_indices = @transform_1, window_bounds = array<i64: 8, 8, 1>}, {pipeline_mode = #tpu.pipeline_mode<synchronous>, transform_indices = @transform_2, window_bounds = array<i64: 32, 32>}, {pipeline_mode = #tpu.pipeline_mode<synchronous>, transform_indices = @transform_3, window_bounds = array<i64: 32, 64>}, {pipeline_mode = #tpu.pipeline_mode<synchronous>, transform_indices = @transform_4, window_bounds = array<i64: 32, 8>}, {pipeline_mode = #tpu.pipeline_mode<synchronous>, transform_indices = @transform_5, window_bounds = array<i64: 32, 32>}, {pipeline_mode = #tpu.pipeline_mode<synchronous>, transform_indices = @transform_6, window_bounds = array<i64: 32, 64>}, {pipeline_mode = #tpu.pipeline_mode<synchronous>, transform_indices = @transform_7, window_bounds = array<i64: 64, 32>}, {pipeline_mode = #tpu.pipeline_mode<synchronous>, transform_indices = @transform_8, window_bounds = array<i64: 9, 64>}, {transform_indices = @transform_9, window_bounds = array<i64: 8, 32>}]} {
    %c0 = arith.constant 0 : index
    %c0_0 = arith.constant 0 : index
    %c0_1 = arith.constant 0 : index
    %0 = vector.load %arg1[%c0, %c0_0, %c0_1] : memref<8x8x32xbf16, #tpu.memory_space<vmem>>, vector<8x8x32xbf16>
    %c0_2 = arith.constant 0 : index
    %c0_3 = arith.constant 0 : index
    %1 = vector.load %arg9[%c0_2, %c0_3] : memref<9x64xf32, #tpu.memory_space<vmem>>, vector<1x32xf32>
    %c1 = arith.constant 1 : index
    %c0_4 = arith.constant 0 : index
    %2 = vector.load %arg9[%c1, %c0_4] : memref<9x64xf32, #tpu.memory_space<vmem>>, vector<1x64xf32>
    %c2 = arith.constant 2 : index
    %c0_5 = arith.constant 0 : index
    %3 = vector.load %arg9[%c2, %c0_5] : memref<9x64xf32, #tpu.memory_space<vmem>>, vector<1x32xf32>
    %c3 = arith.constant 3 : index
    %c0_6 = arith.constant 0 : index
    %4 = vector.load %arg9[%c3, %c0_6] : memref<9x64xf32, #tpu.memory_space<vmem>>, vector<1x64xf32>
    %c4 = arith.constant 4 : index
    %c0_7 = arith.constant 0 : index
    %5 = vector.load %arg9[%c4, %c0_7] : memref<9x64xf32, #tpu.memory_space<vmem>>, vector<1x32xf32>
    %c5 = arith.constant 5 : index
    %c0_8 = arith.constant 0 : index
    %6 = vector.load %arg9[%c5, %c0_8] : memref<9x64xf32, #tpu.memory_space<vmem>>, vector<1x32xf32>
    %c6 = arith.constant 6 : index
    %c0_9 = arith.constant 0 : index
    %7 = vector.load %arg9[%c6, %c0_9] : memref<9x64xf32, #tpu.memory_space<vmem>>, vector<1x32xf32>
    %c7 = arith.constant 7 : index
    %c0_10 = arith.constant 0 : index
    %8 = vector.load %arg9[%c7, %c0_10] : memref<9x64xf32, #tpu.memory_space<vmem>>, vector<1x32xf32>
    %c8 = arith.constant 8 : index
    %c0_11 = arith.constant 0 : index
    %9 = vector.load %arg9[%c8, %c0_11] : memref<9x64xf32, #tpu.memory_space<vmem>>, vector<1x32xf32>
    %10 = vector.shape_cast %0 : vector<8x8x32xbf16> to vector<64x32xbf16>
    %11 = vector.extract_strided_slice %0 {offsets = [0, 7, 0], sizes = [8, 1, 32], strides = [1, 1, 1]} : vector<8x8x32xbf16> to vector<8x1x32xbf16>
    %12 = vector.shape_cast %11 : vector<8x1x32xbf16> to vector<8x32xbf16>
    %13 = arith.extf %12 : vector<8x32xbf16> to vector<8x32xf32>
    %c0_12 = arith.constant 0 : index
    %c0_13 = arith.constant 0 : index
    %14 = vector.load %arg4[%c0_12, %c0_13] : memref<32x64xbf16, #tpu.memory_space<vmem>>, vector<32x64xbf16>
    %cst = arith.constant dense<0.000000e+00> : vector<64x64xf32>
    %15 = tpu.matmul %10, %14, %cst {dimension_numbers = #tpu.dot_dimension_numbers<[1], [0], [0], [1], [0, 0, 1, 1], [], []>} : vector<64x32xbf16>, vector<32x64xbf16>, vector<64x64xf32> -> vector<64x64xf32>
    %16 = vector.broadcast %2 : vector<1x64xf32> to vector<64x64xf32>
    %17 = arith.addf %15, %16 : vector<64x64xf32>
    %18 = vector.shape_cast %17 : vector<64x64xf32> to vector<8x8x64xf32>
    %19 = vector.extract_strided_slice %18 {offsets = [0, 0, 0], sizes = [8, 8, 32], strides = [1, 1, 1]} : vector<8x8x64xf32> to vector<8x8x32xf32>
    %20 = vector.extract_strided_slice %18 {offsets = [0, 0, 32], sizes = [8, 8, 32], strides = [1, 1, 1]} : vector<8x8x64xf32> to vector<8x8x32xf32>
    %c0_14 = arith.constant 0 : index
    %c0_15 = arith.constant 0 : index
    %21 = vector.load %arg3[%c0_14, %c0_15] : memref<32x32xbf16, #tpu.memory_space<vmem>>, vector<32x32xbf16>
    %cst_16 = arith.constant dense<0.000000e+00> : vector<8x32xf32>
    %22 = tpu.matmul %12, %21, %cst_16 {dimension_numbers = #tpu.dot_dimension_numbers<[1], [0], [0], [1], [0, 0, 1, 1], [], []>} : vector<8x32xbf16>, vector<32x32xbf16>, vector<8x32xf32> -> vector<8x32xf32>
    %23 = vector.broadcast %1 : vector<1x32xf32> to vector<8x32xf32>
    %24 = arith.addf %22, %23 : vector<8x32xf32>
    %25 = vector.shape_cast %24 : vector<8x32xf32> to vector<8x1x32xf32>
    %26 = vector.broadcast %25 : vector<8x1x32xf32> to vector<8x8x32xf32>
    %27 = arith.mulf %19, %26 : vector<8x8x32xf32>
    %28 = arith.truncf %27 : vector<8x8x32xf32> to vector<8x8x32xbf16>
    %29 = vector.shape_cast %28 : vector<8x8x32xbf16> to vector<64x32xbf16>
    %c0_17 = arith.constant 0 : index
    %c0_18 = arith.constant 0 : index
    %30 = vector.load %arg5[%c0_17, %c0_18] : memref<32x8xbf16, #tpu.memory_space<vmem>>, vector<32x8xbf16>
    %cst_19 = arith.constant dense<0.000000e+00> : vector<64x8xf32>
    %31 = tpu.matmul %29, %30, %cst_19 {dimension_numbers = #tpu.dot_dimension_numbers<[1], [0], [0], [1], [0, 0, 1, 1], [], []>} : vector<64x32xbf16>, vector<32x8xbf16>, vector<64x8xf32> -> vector<64x8xf32>
    %32 = vector.shape_cast %31 : vector<64x8xf32> to vector<8x8x8xf32>
    %c0_20 = arith.constant 0 : index
    %c0_21 = arith.constant 0 : index
    %c0_22 = arith.constant 0 : index
    %33 = vector.load %arg2[%c0_20, %c0_21, %c0_22] : memref<8x8x1xf32, #tpu.memory_space<vmem>>, vector<8x8x1xf32>
    %34 = vector.broadcast %33 : vector<8x8x1xf32> to vector<8x8x8xf32>
    %35 = arith.addf %32, %34 : vector<8x8x8xf32>
    %cst_23 = arith.constant dense<0xFF800000> : vector<8x8xf32>
    %36 = vector.multi_reduction <maximumf>, %35, %cst_23 [1] : vector<8x8x8xf32> to vector<8x8xf32>
    %37 = vector.shape_cast %36 : vector<8x8xf32> to vector<8x1x8xf32>
    %38 = vector.broadcast %37 : vector<8x1x8xf32> to vector<8x8x8xf32>
    %39 = arith.subf %35, %38 : vector<8x8x8xf32>
    %40 = math.exp %39 : vector<8x8x8xf32>
    %cst_24 = arith.constant dense<0.000000e+00> : vector<8x8xf32>
    %41 = vector.multi_reduction <add>, %40, %cst_24 [1] : vector<8x8x8xf32> to vector<8x8xf32>
    %42 = vector.shape_cast %41 : vector<8x8xf32> to vector<8x1x8xf32>
    %43 = tpu.reciprocal %42 {approx = true} : vector<8x1x8xf32> -> vector<8x1x8xf32>
    %44 = vector.broadcast %43 : vector<8x1x8xf32> to vector<8x8x8xf32>
    %45 = arith.mulf %40, %44 : vector<8x8x8xf32>
    %46 = arith.truncf %45 : vector<8x8x8xf32> to vector<8x8x8xbf16>
    %47 = vector.shape_cast %46 : vector<8x8x8xbf16> to vector<64x8xbf16>
    %c0_25 = arith.constant 0 : index
    %c0_26 = arith.constant 0 : index
    %48 = vector.load %arg5[%c0_25, %c0_26] : memref<32x8xbf16, #tpu.memory_space<vmem>>, vector<32x8xbf16>
    %cst_27 = arith.constant dense<0.000000e+00> : vector<64x32xf32>
    %49 = tpu.matmul %47, %48, %cst_27 {dimension_numbers = #tpu.dot_dimension_numbers<[1], [1], [0], [0], [0, 0, 1, 0], [], []>} : vector<64x8xbf16>, vector<32x8xbf16>, vector<64x32xf32> -> vector<64x32xf32>
    %50 = vector.shape_cast %49 : vector<64x32xf32> to vector<8x8x32xf32>
    %51 = arith.mulf %50, %20 : vector<8x8x32xf32>
    %cst_28 = arith.constant dense<0.000000e+00> : vector<8x32xf32>
    %52 = vector.multi_reduction <add>, %51, %cst_28 [1] : vector<8x8x32xf32> to vector<8x32xf32>
    %53 = arith.truncf %52 : vector<8x32xf32> to vector<8x32xbf16>
    %c0_29 = arith.constant 0 : index
    %c0_30 = arith.constant 0 : index
    %54 = vector.load %arg6[%c0_29, %c0_30] : memref<32x32xbf16, #tpu.memory_space<vmem>>, vector<32x32xbf16>
    %cst_31 = arith.constant dense<0.000000e+00> : vector<8x32xf32>
    %55 = tpu.matmul %53, %54, %cst_31 {dimension_numbers = #tpu.dot_dimension_numbers<[1], [0], [0], [1], [0, 0, 1, 1], [], []>} : vector<8x32xbf16>, vector<32x32xbf16>, vector<8x32xf32> -> vector<8x32xf32>
    %56 = vector.broadcast %3 : vector<1x32xf32> to vector<8x32xf32>
    %57 = arith.addf %55, %56 : vector<8x32xf32>
    %58 = arith.addf %13, %57 : vector<8x32xf32>
    %cst_32 = arith.constant dense<0.000000e+00> : vector<8xf32>
    %59 = vector.multi_reduction <add>, %58, %cst_32 [1] : vector<8x32xf32> to vector<8xf32>
    %60 = vector.shape_cast %59 : vector<8xf32> to vector<8x1xf32>
    %cst_33 = arith.constant 3.200000e+01 : f32
    %61 = vector.broadcast %cst_33 : f32 to vector<8x1xf32>
    %62 = arith.divf %60, %61 : vector<8x1xf32>
    %63 = vector.broadcast %62 : vector<8x1xf32> to vector<8x32xf32>
    %64 = arith.subf %58, %63 : vector<8x32xf32>
    %65 = arith.mulf %64, %64 : vector<8x32xf32>
    %cst_34 = arith.constant dense<0.000000e+00> : vector<8xf32>
    %66 = vector.multi_reduction <add>, %65, %cst_34 [1] : vector<8x32xf32> to vector<8xf32>
    %67 = vector.shape_cast %66 : vector<8xf32> to vector<8x1xf32>
    %cst_35 = arith.constant 3.200000e+01 : f32
    %68 = vector.broadcast %cst_35 : f32 to vector<8x1xf32>
    %69 = arith.divf %67, %68 : vector<8x1xf32>
    %70 = vector.broadcast %62 : vector<8x1xf32> to vector<8x32xf32>
    %71 = arith.subf %58, %70 : vector<8x32xf32>
    %cst_36 = arith.constant 9.99999974E-6 : f32
    %72 = vector.broadcast %cst_36 : f32 to vector<8x1xf32>
    %73 = arith.addf %69, %72 : vector<8x1xf32>
    %74 = math.rsqrt %73 : vector<8x1xf32>
    %75 = vector.broadcast %74 : vector<8x1xf32> to vector<8x32xf32>
    %76 = arith.mulf %71, %75 : vector<8x32xf32>
    %77 = vector.broadcast %6 : vector<1x32xf32> to vector<8x32xf32>
    %78 = arith.mulf %76, %77 : vector<8x32xf32>
    %79 = vector.broadcast %7 : vector<1x32xf32> to vector<8x32xf32>
    %80 = arith.addf %78, %79 : vector<8x32xf32>
    %81 = arith.truncf %80 : vector<8x32xf32> to vector<8x32xbf16>
    %c0_37 = arith.constant 0 : index
    %c0_38 = arith.constant 0 : index
    %82 = vector.load %arg7[%c0_37, %c0_38] : memref<32x64xbf16, #tpu.memory_space<vmem>>, vector<32x64xbf16>
    %cst_39 = arith.constant dense<0.000000e+00> : vector<8x64xf32>
    %83 = tpu.matmul %81, %82, %cst_39 {dimension_numbers = #tpu.dot_dimension_numbers<[1], [0], [0], [1], [0, 0, 1, 1], [], []>} : vector<8x32xbf16>, vector<32x64xbf16>, vector<8x64xf32> -> vector<8x64xf32>
    %84 = vector.broadcast %4 : vector<1x64xf32> to vector<8x64xf32>
    %85 = arith.addf %83, %84 : vector<8x64xf32>
    %cst_40 = arith.constant 0.000000e+00 : f32
    %86 = vector.broadcast %cst_40 : f32 to vector<8x64xf32>
    %87 = arith.maximumf %85, %86 : vector<8x64xf32>
    %88 = arith.truncf %87 : vector<8x64xf32> to vector<8x64xbf16>
    %c0_41 = arith.constant 0 : index
    %c0_42 = arith.constant 0 : index
    %89 = vector.load %arg8[%c0_41, %c0_42] : memref<64x32xbf16, #tpu.memory_space<vmem>>, vector<64x32xbf16>
    %cst_43 = arith.constant dense<0.000000e+00> : vector<8x32xf32>
    %90 = tpu.matmul %88, %89, %cst_43 {dimension_numbers = #tpu.dot_dimension_numbers<[1], [0], [0], [1], [0, 0, 1, 1], [], []>} : vector<8x64xbf16>, vector<64x32xbf16>, vector<8x32xf32> -> vector<8x32xf32>
    %91 = vector.broadcast %5 : vector<1x32xf32> to vector<8x32xf32>
    %92 = arith.addf %90, %91 : vector<8x32xf32>
    %93 = arith.addf %80, %92 : vector<8x32xf32>
    %cst_44 = arith.constant dense<0.000000e+00> : vector<8xf32>
    %94 = vector.multi_reduction <add>, %93, %cst_44 [1] : vector<8x32xf32> to vector<8xf32>
    %95 = vector.shape_cast %94 : vector<8xf32> to vector<8x1xf32>
    %cst_45 = arith.constant 3.200000e+01 : f32
    %96 = vector.broadcast %cst_45 : f32 to vector<8x1xf32>
    %97 = arith.divf %95, %96 : vector<8x1xf32>
    %98 = vector.broadcast %97 : vector<8x1xf32> to vector<8x32xf32>
    %99 = arith.subf %93, %98 : vector<8x32xf32>
    %100 = arith.mulf %99, %99 : vector<8x32xf32>
    %cst_46 = arith.constant dense<0.000000e+00> : vector<8xf32>
    %101 = vector.multi_reduction <add>, %100, %cst_46 [1] : vector<8x32xf32> to vector<8xf32>
    %102 = vector.shape_cast %101 : vector<8xf32> to vector<8x1xf32>
    %cst_47 = arith.constant 3.200000e+01 : f32
    %103 = vector.broadcast %cst_47 : f32 to vector<8x1xf32>
    %104 = arith.divf %102, %103 : vector<8x1xf32>
    %105 = vector.broadcast %97 : vector<8x1xf32> to vector<8x32xf32>
    %106 = arith.subf %93, %105 : vector<8x32xf32>
    %cst_48 = arith.constant 9.99999974E-6 : f32
    %107 = vector.broadcast %cst_48 : f32 to vector<8x1xf32>
    %108 = arith.addf %104, %107 : vector<8x1xf32>
    %109 = math.rsqrt %108 : vector<8x1xf32>
    %110 = vector.broadcast %109 : vector<8x1xf32> to vector<8x32xf32>
    %111 = arith.mulf %106, %110 : vector<8x32xf32>
    %112 = vector.broadcast %8 : vector<1x32xf32> to vector<8x32xf32>
    %113 = arith.mulf %111, %112 : vector<8x32xf32>
    %114 = vector.broadcast %9 : vector<1x32xf32> to vector<8x32xf32>
    %115 = arith.addf %113, %114 : vector<8x32xf32>
    %c0_49 = arith.constant 0 : index
    %c0_50 = arith.constant 0 : index
    %116 = vector.load %arg10[%c0_49, %c0_50] : memref<8x32xf32, #tpu.memory_space<vmem>>, vector<8x32xf32>
    tpu.vector_store %arg10[%c0_49, %c0_50], %115 {strides = array<i32>} : memref<8x32xf32, #tpu.memory_space<vmem>>, vector<8x32xf32>,
    return
  }
  func.func @transform_0(%arg0: i32) -> (i32, i32, i32) {
    %c0_i32 = arith.constant 0 : i32
    %c0_i32_0 = arith.constant 0 : i32
    %c0_i32_1 = arith.constant 0 : i32
    return %arg0, %c0_i32, %c0_i32_0 : i32, i32, i32
  }
  func.func @transform_1(%arg0: i32) -> (i32, i32, i32) {
    %c0_i32 = arith.constant 0 : i32
    %c0_i32_0 = arith.constant 0 : i32
    %c0_i32_1 = arith.constant 0 : i32
    return %arg0, %c0_i32, %c0_i32_0 : i32, i32, i32
  }
  func.func @transform_2(%arg0: i32) -> (i32, i32) {
    %c0_i32 = arith.constant 0 : i32
    %c0_i32_0 = arith.constant 0 : i32
    %c0_i32_1 = arith.constant 0 : i32
    return %c0_i32, %c0_i32_0 : i32, i32
  }
  func.func @transform_3(%arg0: i32) -> (i32, i32) {
    %c0_i32 = arith.constant 0 : i32
    %c0_i32_0 = arith.constant 0 : i32
    %c0_i32_1 = arith.constant 0 : i32
    return %c0_i32, %c0_i32_0 : i32, i32
  }
  func.func @transform_4(%arg0: i32) -> (i32, i32) {
    %c0_i32 = arith.constant 0 : i32
    %c0_i32_0 = arith.constant 0 : i32
    %c0_i32_1 = arith.constant 0 : i32
    return %c0_i32, %c0_i32_0 : i32, i32
  }
  func.func @transform_5(%arg0: i32) -> (i32, i32) {
    %c0_i32 = arith.constant 0 : i32
    %c0_i32_0 = arith.constant 0 : i32
    %c0_i32_1 = arith.constant 0 : i32
    return %c0_i32, %c0_i32_0 : i32, i32
  }
  func.func @transform_6(%arg0: i32) -> (i32, i32) {
    %c0_i32 = arith.constant 0 : i32
    %c0_i32_0 = arith.constant 0 : i32
    %c0_i32_1 = arith.constant 0 : i32
    return %c0_i32, %c0_i32_0 : i32, i32
  }
  func.func @transform_7(%arg0: i32) -> (i32, i32) {
    %c0_i32 = arith.constant 0 : i32
    %c0_i32_0 = arith.constant 0 : i32
    %c0_i32_1 = arith.constant 0 : i32
    return %c0_i32, %c0_i32_0 : i32, i32
  }
  func.func @transform_8(%arg0: i32) -> (i32, i32) {
    %c0_i32 = arith.constant 0 : i32
    %c0_i32_0 = arith.constant 0 : i32
    %c0_i32_1 = arith.constant 0 : i32
    return %c0_i32, %c0_i32_0 : i32, i32
  }
  func.func @transform_9(%arg0: i32) -> (i32, i32) {
    %c0_i32 = arith.constant 0 : i32
    %c0_i32_0 = arith.constant 0 : i32
    return %arg0, %c0_i32 : i32, i32
  }
}

</mosaic_0001>

<llo_original>
// kernel: tpu_custom_call.1
$region0: #{tpu_custom_call.1}
  #allocation0 [shape = 'u32[]', space=smem, size = 0x4, offset = 0x4, fixed_abs, tag = 'smem constant byte address 0x4 - core index']
  #allocation1 [shape = 'u32[144,128]{1,0:T(1,128)}', space=vmem, size = 0x12000, scoped, tag = 'internal scratch']
  %s0 = inlined_call_operand.vmem [shape: bf16[8,8,32], index: 0, kind: input, shape index: {}]
  %s1 = inlined_call_operand.vmem [shape: f32[8,8,1], index: 1, kind: input, shape index: {}]
  %s2 = inlined_call_operand.vmem [shape: bf16[32,32], index: 2, kind: input, shape index: {}]
  %s3 = inlined_call_operand.vmem [shape: bf16[32,64], index: 3, kind: input, shape index: {}]
  %s4 = inlined_call_operand.vmem [shape: bf16[32,8], index: 4, kind: input, shape index: {}]
  %s5 = inlined_call_operand.vmem [shape: bf16[32,32], index: 5, kind: input, shape index: {}]
  %s6 = inlined_call_operand.vmem [shape: bf16[32,64], index: 6, kind: input, shape index: {}]
  %s7 = inlined_call_operand.vmem [shape: bf16[64,32], index: 7, kind: input, shape index: {}]
  %s8 = inlined_call_operand.vmem [shape: f32[9,64], index: 8, kind: input, shape index: {}]
  %s9 = inlined_call_operand.hbm [shape: f32[8,32], index: 9, kind: output, shape index: {}]
  %s10 = sld [smem:[#allocation0]]
  $region46: #{tpu_custom_call.1} parent=0
    _
  %s12 = ssub.s32 1, %s10
  %s13 = scalar_select 0, %s12, %s10
  $region1: #{tpu_custom_call.1} parent=0
    #allocation2 [shape = 'u8[4096]{0}', space=vmem, size = 0x1000, scoped, tag = 'output window, operand 0, single buffered']
    #allocation3 [shape = 's32[1]{0}', space=sflag, size = 0x4, scoped, tag = 'scoped memory for tpu_custom_call.1']
    %14 = vsyncpa [#allocation3], 0
    // Predicated region
    $region2: #{tpu_custom_call.1} parent=1 // pred_check
      _
    $region3: #{tpu_custom_call.1} parent=1 // pred_check_branch
      %16 = sbr.rel (0) target = $region5
    $region4: #{tpu_custom_call.1} parent=1 // pred_region
      _
    $region5: #{tpu_custom_call.1} parent=1 // pred_fallthru
      _
    // Predicated region
    $region6: #{tpu_custom_call.1} parent=1 // pred_check
      _
    $region7: #{tpu_custom_call.1} parent=1 // pred_check_branch
      %18 = sbr.rel (0) target = $region9
    $region8: #{tpu_custom_call.1} parent=1 // pred_region
      _
    $region9: #{tpu_custom_call.1} parent=1 // pred_fallthru
      _
    // Predicated region
    $region10: #{tpu_custom_call.1} parent=1 // pred_check
      _
    $region11: #{tpu_custom_call.1} parent=1 // pred_check_branch
      %20 = sbr.rel (0) target = $region13
    $region12: #{tpu_custom_call.1} parent=1 // pred_region
      _
    $region13: #{tpu_custom_call.1} parent=1 // pred_fallthru
      _
    // Predicated region
    $region14: #{tpu_custom_call.1} parent=1 // pred_check
      _
    $region15: #{tpu_custom_call.1} parent=1 // pred_check_branch
      %22 = sbr.rel (0) target = $region17
    $region16: #{tpu_custom_call.1} parent=1 // pred_region
      _
    $region17: #{tpu_custom_call.1} parent=1 // pred_fallthru
      _
    // Predicated region
    $region18: #{tpu_custom_call.1} parent=1 // pred_check
      _
    $region19: #{tpu_custom_call.1} parent=1 // pred_check_branch
      %24 = sbr.rel (0) target = $region21
    $region20: #{tpu_custom_call.1} parent=1 // pred_region
      _
    $region21: #{tpu_custom_call.1} parent=1 // pred_fallthru
      _
    // Predicated region
    $region22: #{tpu_custom_call.1} parent=1 // pred_check
      _
    $region23: #{tpu_custom_call.1} parent=1 // pred_check_branch
      %26 = sbr.rel (0) target = $region25
    $region24: #{tpu_custom_call.1} parent=1 // pred_region
      _
    $region25: #{tpu_custom_call.1} parent=1 // pred_fallthru
      _
    // Predicated region
    $region26: #{tpu_custom_call.1} parent=1 // pred_check
      _
    $region27: #{tpu_custom_call.1} parent=1 // pred_check_branch
      %28 = sbr.rel (0) target = $region29
    $region28: #{tpu_custom_call.1} parent=1 // pred_region
      _
    $region29: #{tpu_custom_call.1} parent=1 // pred_fallthru
      _
    // Predicated region
    $region30: #{tpu_custom_call.1} parent=1 // pred_check
      _
    $region31: #{tpu_custom_call.1} parent=1 // pred_check_branch
      %30 = sbr.rel (0) target = $region33
    $region32: #{tpu_custom_call.1} parent=1 // pred_region
      _
    $region33: #{tpu_custom_call.1} parent=1 // pred_fallthru
      _
    // Predicated region
    $region34: #{tpu_custom_call.1} parent=1 // pred_check
      _
    $region35: #{tpu_custom_call.1} parent=1 // pred_check_branch
      %32 = sbr.rel (0) target = $region37
    $region36: #{tpu_custom_call.1} parent=1 // pred_region
      _
    $region37: #{tpu_custom_call.1} parent=1 // pred_fallthru
      _
    %v34 = vld [vmem:[%s0] sm:$0xf]
    %v35 = vld [vmem:[%s0 + $0x4] sm:$0xf]
    %v36 = vld [vmem:[%s0 + $0x8] sm:$0xf]
    %v37 = vld [vmem:[%s0 + $0xc] sm:$0xf]
    %v38 = vld [vmem:[%s0 + $0x10] sm:$0xf]
    %v39 = vld [vmem:[%s0 + $0x14] sm:$0xf]
    %v40 = vld [vmem:[%s0 + $0x18] sm:$0xf]
    %v41 = vld [vmem:[%s0 + $0x1c] sm:$0xf]
    %v42 = vld [vmem:[%s8] sm:$0x1]
    %v43 = vld [vmem:[%s8 + $0x1] sm:$0x1]
    %v44 = vld [vmem:[%s8 + $0x2] sm:$0x1]
    %v45 = vld [vmem:[%s8 + $0x3] sm:$0x1]
    %v46 = vld [vmem:[%s8 + $0x4] sm:$0x1]
    %v47 = vld [vmem:[%s8 + $0x5] sm:$0x1]
    %v48 = vld [vmem:[%s8 + $0x6] sm:$0x1]
    %v49 = vld [vmem:[%s8 + $0x7] sm:$0x1]
    %v50 = vld [vmem:[%s8 + $0x8] sm:$0x1]
    %v51 = vunpack.c.l.bf16 %v34
    %v52 = vunpack.c.l.bf16 %v35
    %v53 = vunpack.c.l.bf16 %v36
    %v54 = vunpack.c.l.bf16 %v37
    %v55 = vunpack.c.l.bf16 %v38
    %v56 = vunpack.c.l.bf16 %v39
    %v57 = vunpack.c.l.bf16 %v40
    %v58 = vunpack.c.l.bf16 %v41
    %v59 = vld [vmem:[%s3] sm:$0xf]
    %v60 = vld [vmem:[%s3 + $0x4] sm:$0xf]
    %v61 = vld [vmem:[%s3 + $0x8] sm:$0xf]
    %v62 = vld [vmem:[%s3 + $0xc] sm:$0xf]
    %v63 = vlaneseq
    %v64 = vshrl.u32 %v63, 7
    %v65 = vsub.s32 0, %v64
    %v66 = vrot.slane %v43, %v65
    %v75 = vunpack.c.l.b16 %v34
    %v76 = vunpack.c.l.b16 %v35
    %v77 = vunpack.c.l.b16 %v36
    %v78 = vunpack.c.l.b16 %v37
    %v79 = vunpack.c.l.b16 %v38
    %v80 = vunpack.c.l.b16 %v39
    %v81 = vunpack.c.l.b16 %v40
    %v82 = vunpack.c.l.b16 %v41
    %v83 = vpack.c.b16 %v76, %v75
    %v84 = vpack.c.b16 %v78, %v77
    %v85 = vpack.c.b16 %v80, %v79
    %v86 = vpack.c.b16 %v82, %v81
    %v91 = vunpack.c.l.b16 %v59
    %v92 = vunpack.c.l.b16 %v60
    %v93 = vunpack.c.l.b16 %v61
    %v94 = vunpack.c.l.b16 %v62
    %v95 = vpack.c.b16 %v92, %v91
    %v96 = vpack.c.b16 %v94, %v93
    %vm99 = vcmask 261120
    %v101 = vsel %vm99, %v83, 0
    %v104 = vsel %vm99, %v84, 0
    %v107 = vsel %vm99, %v85, 0
    %v110 = vsel %vm99, %v86, 0
    %112 = vmatprep.subr.bf16.mxu0 0
    %113 = vmatpush1.bf16.msra.mxu0 0
    %114 = vmatprep.subr.bf16.mxu0 0
    %115 = vmatpush1.bf16.msra.mxu0 0
    %116 = vmatprep.subr.bf16.mxu0 0
    %117 = vmatpush1.bf16.msra.mxu0 0
    %118 = vmatprep.subr.bf16.mxu0 0
    %119 = vmatpush1.bf16.msra.mxu0 0
    %120 = vmatprep.subr.bf16.mxu0 0
    %121 = vmatpush1.bf16.msra.mxu0 0
    %122 = vmatprep.subr.bf16.mxu0 0
    %123 = vmatpush1.bf16.msra.mxu0 0
    %124 = vmatprep.subr.bf16.mxu0 0
    %125 = vmatpush1.bf16.msra.mxu0 %v96
    %126 = vmatprep.subr.bf16.mxu0 0
    %127 = vmatpush1.bf16.msra.mxu0 %v95
    %128 = vmatprep.subr.bf16.mxu0 0
    %129 = vmatpush2.bf16.msra.mxu0 0
    %130 = vmatprep.subr.bf16.mxu0 0
    %131 = vmatpush2.bf16.msra.mxu0 0
    %132 = vmatprep.subr.bf16.mxu0 0
    %133 = vmatpush2.bf16.msra.mxu0 0
    %134 = vmatprep.subr.bf16.mxu0 0
    %135 = vmatpush2.bf16.msra.mxu0 0
    %136 = vmatprep.subr.bf16.mxu0 0
    %137 = vmatpush2.bf16.msra.mxu0 0
    %138 = vmatprep.subr.bf16.mxu0 0
    %139 = vmatpush2.bf16.msra.mxu0 0
    %140 = vmatprep.subr.bf16.mxu0 0
    %141 = vmatpush2.bf16.msra.mxu0 0
    %142 = vmatprep.subr.bf16.mxu0 0
    %143 = vmatpush2.bf16.msra.mxu0 0
    %144 = vmatprep.mubr.bf16.mxu0 0
    %145 = vmatmul.mubr.bf16.gmra.mxu0 %v101
    %v146 = vpop.f32.mrf.mxu0
    %v147 = vadd.f32 %v66, %v146
    %v148 = vpop.f32.mrf.mxu0
    %v149 = vpop.f32.mrf.mxu0
    %v150 = vadd.f32 %v66, %v149
    %v151 = vpop.f32.mrf.mxu0
    %152 = vmatprep.mubr.bf16.mxu0 0
    %153 = vmatmul.mubr.bf16.gmra.mxu0 %v104
    %v154 = vpop.f32.mrf.mxu0
    %v155 = vadd.f32 %v66, %v154
    %v156 = vpop.f32.mrf.mxu0
    %v157 = vpop.f32.mrf.mxu0
    %v158 = vadd.f32 %v66, %v157
    %v159 = vpop.f32.mrf.mxu0
    %160 = vmatprep.mubr.bf16.mxu0 0
    %161 = vmatmul.mubr.bf16.gmra.mxu0 %v107
    %v162 = vpop.f32.mrf.mxu0
    %v163 = vadd.f32 %v66, %v162
    %v164 = vpop.f32.mrf.mxu0
    %v165 = vpop.f32.mrf.mxu0
    %v166 = vadd.f32 %v66, %v165
    %v167 = vpop.f32.mrf.mxu0
    %168 = vmatprep.mubr.bf16.mxu0 0
    %169 = vmatmul.mubr.bf16.gmra.mxu0 %v110
    %v170 = vpop.f32.mrf.mxu0
    %v171 = vadd.f32 %v66, %v170
    %v172 = vpop.f32.mrf.mxu0
    %v173 = vpop.f32.mrf.mxu0
    %v174 = vadd.f32 %v66, %v173
    %v175 = vpop.f32.mrf.mxu0
    %176 = vdwg.mxu0
    %v177 = vld [vmem:[%s2] sm:$0xf]
    %v178 = vld [vmem:[%s2 + $0x4] sm:$0xf]
    %v179 = vld [vmem:[%s2 + $0x8] sm:$0xf]
    %v180 = vld [vmem:[%s2 + $0xc] sm:$0xf]
    %v181 = vlaneseq
    %v182 = vshrl.u32 %v181, 7
    %v183 = vsub.s32 0, %v182
    %v184 = vrot.slane %v42, %v183
    %v185 = vpack.c.b16 %v75, %v75
    %v186 = vpack.c.b16 %v76, %v76
    %v187 = vpack.c.b16 %v77, %v77
    %v188 = vpack.c.b16 %v78, %v78
    %v189 = vpack.c.b16 %v79, %v79
    %v190 = vpack.c.b16 %v80, %v80
    %v191 = vpack.c.b16 %v81, %v81
    %v192 = vpack.c.b16 %v82, %v82
    %v193 = vunpack.c.l.b16 %v185
    %v194 = vunpack.c.l.b16 %v186
    %v195 = vunpack.c.l.b16 %v187
    %v196 = vunpack.c.l.b16 %v188
    %v197 = vunpack.c.l.b16 %v189
    %v198 = vunpack.c.l.b16 %v190
    %v199 = vunpack.c.l.b16 %v191
    %v200 = vunpack.c.l.b16 %v192
    %v201 = vrot.slane %v193, 7
    %v202 = vrot.slane %v194, 6
    %vm203 = vcmask 1041409
    %v204 = vsel %vm203, %v202, %v201
    %v205 = vrot.slane %v195, 5
    %vm206 = vcmask 1042434
    %v207 = vsel %vm206, %v205, %v204
    %v208 = vrot.slane %v196, 4
    %vm209 = vcmask 1043459
    %v210 = vsel %vm209, %v208, %v207
    %v211 = vrot.slane %v197, 3
    %vm212 = vcmask 1044484
    %v213 = vsel %vm212, %v211, %v210
    %v214 = vrot.slane %v198, 2
    %vm215 = vcmask 1045509
    %v216 = vsel %vm215, %v214, %v213
    %v217 = vrot.slane %v199, 1
    %vm218 = vcmask 1046534
    %v219 = vsel %vm218, %v217, %v216
    %vm220 = vcmask 1047559
    %v221 = vsel %vm220, %v200, %v219
    %v222 = vpack.c.b16 %v221, %v221
    %v227 = vunpack.c.l.b16 %v177
    %v228 = vunpack.c.l.b16 %v178
    %v229 = vunpack.c.l.b16 %v179
    %v230 = vunpack.c.l.b16 %v180
    %v231 = vpack.c.b16 %v228, %v227
    %v232 = vpack.c.b16 %v230, %v229
    %v236 = vsel %vm99, %v222, 0
    %238 = vmatprep.subr.bf16.mxu0 0
    %239 = vmatpush1.bf16.msra.mxu0 0
    %240 = vmatprep.subr.bf16.mxu0 0
    %241 = vmatpush1.bf16.msra.mxu0 0
    %242 = vmatprep.subr.bf16.mxu0 0
    %243 = vmatpush1.bf16.msra.mxu0 0
    %244 = vmatprep.subr.bf16.mxu0 0
    %245 = vmatpush1.bf16.msra.mxu0 0
    %246 = vmatprep.subr.bf16.mxu0 0
    %247 = vmatpush1.bf16.msra.mxu0 0
    %248 = vmatprep.subr.bf16.mxu0 0
    %249 = vmatpush1.bf16.msra.mxu0 0
    %250 = vmatprep.subr.bf16.mxu0 0
    %251 = vmatpush1.bf16.msra.mxu0 %v232
    %252 = vmatprep.subr.bf16.mxu0 0
    %253 = vmatpush1.bf16.msra.mxu0 %v231
    %254 = vmatprep.subr.bf16.mxu0 0
    %255 = vmatpush2.bf16.msra.mxu0 0
    %256 = vmatprep.subr.bf16.mxu0 0
    %257 = vmatpush2.bf16.msra.mxu0 0
    %258 = vmatprep.subr.bf16.mxu0 0
    %259 = vmatpush2.bf16.msra.mxu0 0
    %260 = vmatprep.subr.bf16.mxu0 0
    %261 = vmatpush2.bf16.msra.mxu0 0
    %262 = vmatprep.subr.bf16.mxu0 0
    %263 = vmatpush2.bf16.msra.mxu0 0
    %264 = vmatprep.subr.bf16.mxu0 0
    %265 = vmatpush2.bf16.msra.mxu0 0
    %266 = vmatprep.subr.bf16.mxu0 0
    %267 = vmatpush2.bf16.msra.mxu0 0
    %268 = vmatprep.subr.bf16.mxu0 0
    %269 = vmatpush2.bf16.msra.mxu0 0
    %270 = vmatprep.mubr.bf16.mxu0 0
    %271 = vmatmul.mubr.bf16.gmra.mxu0 %v236
    %v272 = vpop.f32.mrf.mxu0
    %v273 = vadd.f32 %v184, %v272
    %v274 = vpop.f32.mrf.mxu0
    %v275 = vpop.f32.mrf.mxu0
    %v276 = vpop.f32.mrf.mxu0
    %277 = vdwg.mxu0
    %v279 = vcombine.high %v273, %v273
    %v281 = vunpack.c.l.s4 1966171168
    %v282 = vunpack.c.0.s8 %v281
    %v283 = vlaneseq
    %v284 = vshrl.u32 %v283, 7
    %v285 = vsub.s32 %v282, %v284
    %v286 = vrot.slane %v273, %v285
    %v288 = vunpack.c.l.s4 1966171168
    %v289 = vunpack.c.0.s8 %v288
    %v290 = vlaneseq
    %v291 = vshrl.u32 %v290, 7
    %v292 = vsub.s32 %v289, %v291
    %v293 = vrot.slane %v279, %v292
    %v294 = vcombine.high %v286, %v286
    %v295 = vcombine.high %v293, %v293
    %v297 = vunpack.c.l.s4 1966171168
    %v298 = vunpack.c.0.s8 %v297
    %v299 = vlaneseq
    %v300 = vshrl.u32 %v299, 7
    %v301 = vsub.s32 %v298, %v300
    %v302 = vrot.slane %v286, %v301
    %v304 = vunpack.c.l.s4 1966171168
    %v305 = vunpack.c.0.s8 %v304
    %v306 = vlaneseq
    %v307 = vshrl.u32 %v306, 7
    %v308 = vsub.s32 %v305, %v307
    %v309 = vrot.slane %v293, %v308
    %v311 = vunpack.c.l.s4 1966171168
    %v312 = vunpack.c.0.s8 %v311
    %v313 = vlaneseq
    %v314 = vshrl.u32 %v313, 7
    %v315 = vsub.s32 %v312, %v314
    %v316 = vrot.slane %v294, %v315
    %v318 = vunpack.c.l.s4 1966171168
    %v319 = vunpack.c.0.s8 %v318
    %v320 = vlaneseq
    %v321 = vshrl.u32 %v320, 7
    %v322 = vsub.s32 %v319, %v321
    %v323 = vrot.slane %v295, %v322
    %v324 = vcombine.high %v302, %v302
    %v325 = vcombine.high %v309, %v309
    %v326 = vcombine.high %v316, %v316
    %v327 = vcombine.high %v323, %v323
    %v328 = vlaneseq
    %v329 = vshrl.u32 %v328, 7
    %v330 = vsub.s32 0, %v329
    %v331 = vrot.slane %v302, %v330
    %v332 = vlaneseq
    %v333 = vshrl.u32 %v332, 7
    %v334 = vsub.s32 0, %v333
    %v335 = vrot.slane %v316, %v334
    %v336 = vlaneseq
    %v337 = vshrl.u32 %v336, 7
    %v338 = vsub.s32 0, %v337
    %v339 = vrot.slane %v324, %v338
    %v340 = vlaneseq
    %v341 = vshrl.u32 %v340, 7
    %v342 = vsub.s32 0, %v341
    %v343 = vrot.slane %v326, %v342
    %v344 = vlaneseq
    %v345 = vshrl.u32 %v344, 7
    %v346 = vsub.s32 0, %v345
    %v347 = vrot.slane %v309, %v346
    %v348 = vlaneseq
    %v349 = vshrl.u32 %v348, 7
    %v350 = vsub.s32 0, %v349
    %v351 = vrot.slane %v323, %v350
    %v352 = vlaneseq
    %v353 = vshrl.u32 %v352, 7
    %v354 = vsub.s32 0, %v353
    %v355 = vrot.slane %v325, %v354
    %v356 = vlaneseq
    %v357 = vshrl.u32 %v356, 7
    %v358 = vsub.s32 0, %v357
    %v359 = vrot.slane %v327, %v358
    %v368 = vmul.f32 %v147, %v331
    %v369 = vmul.f32 %v150, %v335
    %v370 = vmul.f32 %v155, %v339
    %v371 = vmul.f32 %v158, %v343
    %v372 = vmul.f32 %v163, %v347
    %v373 = vmul.f32 %v166, %v351
    %v374 = vmul.f32 %v171, %v355
    %v375 = vmul.f32 %v174, %v359
    %v376 = vpack.c.bf16 %v368, %v368
    %v377 = vpack.c.bf16 %v369, %v369
    %v378 = vpack.c.bf16 %v370, %v370
    %v379 = vpack.c.bf16 %v371, %v371
    %v380 = vpack.c.bf16 %v372, %v372
    %v381 = vpack.c.bf16 %v373, %v373
    %v382 = vpack.c.bf16 %v374, %v374
    %v383 = vpack.c.bf16 %v375, %v375
    %v384 = vld [vmem:[%s4] sm:$0xf]
    %v385 = vld [vmem:[%s4 + $0x4] sm:$0xf]
    %v386 = vld [vmem:[%s4 + $0x8] sm:$0xf]
    %v387 = vld [vmem:[%s4 + $0xc] sm:$0xf]
    %v396 = vunpack.c.l.b16 %v376
    %v397 = vunpack.c.l.b16 %v377
    %v398 = vunpack.c.l.b16 %v378
    %v399 = vunpack.c.l.b16 %v379
    %v400 = vunpack.c.l.b16 %v380
    %v401 = vunpack.c.l.b16 %v381
    %v402 = vunpack.c.l.b16 %v382
    %v403 = vunpack.c.l.b16 %v383
    %v404 = vpack.c.b16 %v397, %v396
    %v405 = vpack.c.b16 %v399, %v398
    %v406 = vpack.c.b16 %v401, %v400
    %v407 = vpack.c.b16 %v403, %v402
    %v412 = vunpack.c.l.b16 %v384
    %v413 = vunpack.c.l.b16 %v385
    %v414 = vunpack.c.l.b16 %v386
    %v415 = vunpack.c.l.b16 %v387
    %v416 = vpack.c.b16 %v413, %v412
    %v417 = vpack.c.b16 %v415, %v414
    %v421 = vsel %vm99, %v404, 0
    %v424 = vsel %vm99, %v405, 0
    %v427 = vsel %vm99, %v406, 0
    %v430 = vsel %vm99, %v407, 0
    %432 = vmatprep.subr.bf16.mxu0 0
    %433 = vmatpush1.bf16.msra.mxu0 0
    %434 = vmatprep.subr.bf16.mxu0 0
    %435 = vmatpush1.bf16.msra.mxu0 0
    %436 = vmatprep.subr.bf16.mxu0 0
    %437 = vmatpush1.bf16.msra.mxu0 0
    %438 = vmatprep.subr.bf16.mxu0 0
    %439 = vmatpush1.bf16.msra.mxu0 0
    %440 = vmatprep.subr.bf16.mxu0 0
    %441 = vmatpush1.bf16.msra.mxu0 0
    %442 = vmatprep.subr.bf16.mxu0 0
    %443 = vmatpush1.bf16.msra.mxu0 0
    %444 = vmatprep.subr.bf16.mxu0 0
    %445 = vmatpush1.bf16.msra.mxu0 %v417
    %446 = vmatprep.subr.bf16.mxu0 0
    %447 = vmatpush1.bf16.msra.mxu0 %v416
    %448 = vmatprep.subr.bf16.mxu0 0
    %449 = vmatpush2.bf16.msra.mxu0 0
    %450 = vmatprep.subr.bf16.mxu0 0
    %451 = vmatpush2.bf16.msra.mxu0 0
    %452 = vmatprep.subr.bf16.mxu0 0
    %453 = vmatpush2.bf16.msra.mxu0 0
    %454 = vmatprep.subr.bf16.mxu0 0
    %455 = vmatpush2.bf16.msra.mxu0 0
    %456 = vmatprep.subr.bf16.mxu0 0
    %457 = vmatpush2.bf16.msra.mxu0 0
    %458 = vmatprep.subr.bf16.mxu0 0
    %459 = vmatpush2.bf16.msra.mxu0 0
    %460 = vmatprep.subr.bf16.mxu0 0
    %461 = vmatpush2.bf16.msra.mxu0 0
    %462 = vmatprep.subr.bf16.mxu0 0
    %463 = vmatpush2.bf16.msra.mxu0 0
    %464 = vmatprep.mubr.bf16.mxu0 0
    %465 = vmatmul.mubr.bf16.gmra.mxu0 %v421
    %v466 = vpop.f32.mrf.mxu0
    %v467 = vadd.f32 0.0, %v466
    %v468 = vpop.f32.mrf.mxu0
    %v469 = vpop.f32.mrf.mxu0
    %v470 = vadd.f32 0.0, %v469
    %v471 = vpop.f32.mrf.mxu0
    %472 = vmatprep.mubr.bf16.mxu0 0
    %473 = vmatmul.mubr.bf16.gmra.mxu0 %v424
    %v474 = vpop.f32.mrf.mxu0
    %v475 = vadd.f32 0.0, %v474
    %v476 = vpop.f32.mrf.mxu0
    %v477 = vpop.f32.mrf.mxu0
    %v478 = vadd.f32 0.0, %v477
    %v479 = vpop.f32.mrf.mxu0
    %480 = vmatprep.mubr.bf16.mxu0 0
    %481 = vmatmul.mubr.bf16.gmra.mxu0 %v427
    %v482 = vpop.f32.mrf.mxu0
    %v483 = vadd.f32 0.0, %v482
    %v484 = vpop.f32.mrf.mxu0
    %v485 = vpop.f32.mrf.mxu0
    %v486 = vadd.f32 0.0, %v485
    %v487 = vpop.f32.mrf.mxu0
    %488 = vmatprep.mubr.bf16.mxu0 0
    %489 = vmatmul.mubr.bf16.gmra.mxu0 %v430
    %v490 = vpop.f32.mrf.mxu0
    %v491 = vadd.f32 0.0, %v490
    %v492 = vpop.f32.mrf.mxu0
    %v493 = vpop.f32.mrf.mxu0
    %v494 = vadd.f32 0.0, %v493
    %v495 = vpop.f32.mrf.mxu0
    %496 = vdwg.mxu0
    %v497 = vld [vmem:[%s1] sm:$0xff]
    %v498 = vld [vmem:[%s1 + $0x8] sm:$0xff]
    %v499 = vld [vmem:[%s1 + $0x10] sm:$0xff]
    %v500 = vld [vmem:[%s1 + $0x18] sm:$0xff]
    %v501 = vld [vmem:[%s1 + $0x20] sm:$0xff]
    %v502 = vld [vmem:[%s1 + $0x28] sm:$0xff]
    %v503 = vld [vmem:[%s1 + $0x30] sm:$0xff]
    %v504 = vld [vmem:[%s1 + $0x38] sm:$0xff]
    %506 = vset.pattern.permute.xlu0 0
    %507 = vperm.xlu0 %506, %v497
    %v508 = vpop.permute.xlu0 %507
    %511 = vset.pattern.permute.xlu0 0
    %512 = vperm.xlu0 %511, %v498
    %v513 = vpop.permute.xlu0 %512
    %516 = vset.pattern.permute.xlu0 0
    %517 = vperm.xlu0 %516, %v499
    %v518 = vpop.permute.xlu0 %517
    %521 = vset.pattern.permute.xlu0 0
    %522 = vperm.xlu0 %521, %v500
    %v523 = vpop.permute.xlu0 %522
    %526 = vset.pattern.permute.xlu0 0
    %527 = vperm.xlu0 %526, %v501
    %v528 = vpop.permute.xlu0 %527
    %531 = vset.pattern.permute.xlu0 0
    %532 = vperm.xlu0 %531, %v502
    %v533 = vpop.permute.xlu0 %532
    %536 = vset.pattern.permute.xlu0 0
    %537 = vperm.xlu0 %536, %v503
    %v538 = vpop.permute.xlu0 %537
    %541 = vset.pattern.permute.xlu0 0
    %542 = vperm.xlu0 %541, %v504
    %v543 = vpop.permute.xlu0 %542
    %v545 = vadd.f32 %v467, %v508
    %v546 = vadd.f32 %v470, %v513
    %v547 = vadd.f32 %v475, %v518
    %v548 = vadd.f32 %v478, %v523
    %v549 = vadd.f32 %v483, %v528
    %v550 = vadd.f32 %v486, %v533
    %v551 = vadd.f32 %v491, %v538
    %v552 = vadd.f32 %v494, %v543
    %vm553 = vcmask 64512
    %v554 = vsel %vm553, %v545, -inf
    %v555 = vrot.slane %v554, 4
    %v556 = vmax.f32 %v554, %v555
    %v557 = vrot.slane %v556, 2
    %v558 = vmax.f32 %v556, %v557
    %v559 = vrot.slane %v558, 1
    %v560 = vmax.f32 %v558, %v559
    %v561 = vsel %vm553, %v546, -inf
    %v562 = vrot.slane %v561, 4
    %v563 = vmax.f32 %v561, %v562
    %v564 = vrot.slane %v563, 2
    %v565 = vmax.f32 %v563, %v564
    %v566 = vrot.slane %v565, 1
    %v567 = vmax.f32 %v565, %v566
    %v568 = vsel %vm553, %v547, -inf
    %v569 = vrot.slane %v568, 4
    %v570 = vmax.f32 %v568, %v569
    %v571 = vrot.slane %v570, 2
    %v572 = vmax.f32 %v570, %v571
    %v573 = vrot.slane %v572, 1
    %v574 = vmax.f32 %v572, %v573
    %v575 = vsel %vm553, %v548, -inf
    %v576 = vrot.slane %v575, 4
    %v577 = vmax.f32 %v575, %v576
    %v578 = vrot.slane %v577, 2
    %v579 = vmax.f32 %v577, %v578
    %v580 = vrot.slane %v579, 1
    %v581 = vmax.f32 %v579, %v580
    %v582 = vsel %vm553, %v549, -inf
    %v583 = vrot.slane %v582, 4
    %v584 = vmax.f32 %v582, %v583
    %v585 = vrot.slane %v584, 2
    %v586 = vmax.f32 %v584, %v585
    %v587 = vrot.slane %v586, 1
    %v588 = vmax.f32 %v586, %v587
    %v589 = vsel %vm553, %v550, -inf
    %v590 = vrot.slane %v589, 4
    %v591 = vmax.f32 %v589, %v590
    %v592 = vrot.slane %v591, 2
    %v593 = vmax.f32 %v591, %v592
    %v594 = vrot.slane %v593, 1
    %v595 = vmax.f32 %v593, %v594
    %v596 = vsel %vm553, %v551, -inf
    %v597 = vrot.slane %v596, 4
    %v598 = vmax.f32 %v596, %v597
    %v599 = vrot.slane %v598, 2
    %v600 = vmax.f32 %v598, %v599
    %v601 = vrot.slane %v600, 1
    %v602 = vmax.f32 %v600, %v601
    %v603 = vsel %vm553, %v552, -inf
    %v604 = vrot.slane %v603, 4
    %v605 = vmax.f32 %v603, %v604
    %v606 = vrot.slane %v605, 2
    %v607 = vmax.f32 %v605, %v606
    %v608 = vrot.slane %v607, 1
    %v609 = vmax.f32 %v607, %v608
    %v610 = vsub.f32 %v545, %v560
    %v611 = vsub.f32 %v546, %v567
    %v612 = vsub.f32 %v547, %v574
    %v613 = vsub.f32 %v548, %v581
    %v614 = vsub.f32 %v549, %v588
    %v615 = vsub.f32 %v550, %v595
    %v616 = vsub.f32 %v551, %v602
    %v617 = vsub.f32 %v552, %v609
    %v618 = vmul.f32 %v610, 1.442695
    %v619 = vpow.pop %v618
    %v620 = vmul.f32 %v611, 1.442695
    %v621 = vpow.pop %v620
    %v622 = vmul.f32 %v612, 1.442695
    %v623 = vpow.pop %v622
    %v624 = vmul.f32 %v613, 1.442695
    %v625 = vpow.pop %v624
    %v626 = vmul.f32 %v614, 1.442695
    %v627 = vpow.pop %v626
    %v628 = vmul.f32 %v615, 1.442695
    %v629 = vpow.pop %v628
    %v630 = vmul.f32 %v616, 1.442695
    %v631 = vpow.pop %v630
    %v632 = vmul.f32 %v617, 1.442695
    %v633 = vpow.pop %v632
    %v634 = vsel %vm553, %v619, 0.0
    %v635 = vrot.slane %v634, 4
    %v636 = vadd.f32 %v634, %v635
    %v637 = vrot.slane %v636, 2
    %v638 = vadd.f32 %v636, %v637
    %v639 = vrot.slane %v638, 1
    %v640 = vadd.f32 %v638, %v639
    %v641 = vsel %vm553, %v621, 0.0
    %v642 = vrot.slane %v641, 4
    %v643 = vadd.f32 %v641, %v642
    %v644 = vrot.slane %v643, 2
    %v645 = vadd.f32 %v643, %v644
    %v646 = vrot.slane %v645, 1
    %v647 = vadd.f32 %v645, %v646
    %v648 = vsel %vm553, %v623, 0.0
    %v649 = vrot.slane %v648, 4
    %v650 = vadd.f32 %v648, %v649
    %v651 = vrot.slane %v650, 2
    %v652 = vadd.f32 %v650, %v651
    %v653 = vrot.slane %v652, 1
    %v654 = vadd.f32 %v652, %v653
    %v655 = vsel %vm553, %v625, 0.0
    %v656 = vrot.slane %v655, 4
    %v657 = vadd.f32 %v655, %v656
    %v658 = vrot.slane %v657, 2
    %v659 = vadd.f32 %v657, %v658
    %v660 = vrot.slane %v659, 1
    %v661 = vadd.f32 %v659, %v660
    %v662 = vsel %vm553, %v627, 0.0
    %v663 = vrot.slane %v662, 4
    %v664 = vadd.f32 %v662, %v663
    %v665 = vrot.slane %v664, 2
    %v666 = vadd.f32 %v664, %v665
    %v667 = vrot.slane %v666, 1
    %v668 = vadd.f32 %v666, %v667
    %v669 = vsel %vm553, %v629, 0.0
    %v670 = vrot.slane %v669, 4
    %v671 = vadd.f32 %v669, %v670
    %v672 = vrot.slane %v671, 2
    %v673 = vadd.f32 %v671, %v672
    %v674 = vrot.slane %v673, 1
    %v675 = vadd.f32 %v673, %v674
    %v676 = vsel %vm553, %v631, 0.0
    %v677 = vrot.slane %v676, 4
    %v678 = vadd.f32 %v676, %v677
    %v679 = vrot.slane %v678, 2
    %v680 = vadd.f32 %v678, %v679
    %v681 = vrot.slane %v680, 1
    %v682 = vadd.f32 %v680, %v681
    %v683 = vsel %vm553, %v633, 0.0
    %v684 = vrot.slane %v683, 4
    %v685 = vadd.f32 %v683, %v684
    %v686 = vrot.slane %v685, 2
    %v687 = vadd.f32 %v685, %v686
    %v688 = vrot.slane %v687, 1
    %v689 = vadd.f32 %v687, %v688
    %v690 = vrcp.pop %v640
    %v691 = vrcp.pop %v647
    %v692 = vrcp.pop %v654
    %v693 = vrcp.pop %v661
    %v694 = vrcp.pop %v668
    %v695 = vrcp.pop %v675
    %v696 = vrcp.pop %v682
    %v697 = vrcp.pop %v689
    %v698 = vmul.f32 %v619, %v690
    %v699 = vmul.f32 %v621, %v691
    %v700 = vmul.f32 %v623, %v692
    %v701 = vmul.f32 %v625, %v693
    %v702 = vmul.f32 %v627, %v694
    %v703 = vmul.f32 %v629, %v695
    %v704 = vmul.f32 %v631, %v696
    %v705 = vmul.f32 %v633, %v697
    %v706 = vpack.c.bf16 %v698, %v698
    %v707 = vpack.c.bf16 %v699, %v699
    %v708 = vpack.c.bf16 %v700, %v700
    %v709 = vpack.c.bf16 %v701, %v701
    %v710 = vpack.c.bf16 %v702, %v702
    %v711 = vpack.c.bf16 %v703, %v703
    %v712 = vpack.c.bf16 %v704, %v704
    %v713 = vpack.c.bf16 %v705, %v705
    %v722 = vunpack.c.l.b16 %v706
    %v723 = vunpack.c.l.b16 %v707
    %v724 = vunpack.c.l.b16 %v708
    %v725 = vunpack.c.l.b16 %v709
    %v726 = vunpack.c.l.b16 %v710
    %v727 = vunpack.c.l.b16 %v711
    %v728 = vunpack.c.l.b16 %v712
    %v729 = vunpack.c.l.b16 %v713
    %v730 = vpack.c.b16 %v723, %v722
    %v731 = vpack.c.b16 %v725, %v724
    %v732 = vpack.c.b16 %v727, %v726
    %v733 = vpack.c.b16 %v729, %v728
    %v735 = vsel %vm553, %v730, 0
    %v738 = vsel %vm553, %v731, 0
    %v741 = vsel %vm553, %v732, 0
    %v744 = vsel %vm553, %v733, 0
    %v747 = vsel %vm553, %v416, 0
    %v750 = vsel %vm553, %v417, 0
    %752 = vmatprep.subr.bf16.mxu0 0
    %753 = vmatpush1.bf16.xpose.msra.mxu0 0
    %754 = vmatprep.subr.bf16.mxu0 0
    %755 = vmatpush1.bf16.xpose.msra.mxu0 0
    %756 = vmatprep.subr.bf16.mxu0 0
    %757 = vmatpush1.bf16.xpose.msra.mxu0 0
    %758 = vmatprep.subr.bf16.mxu0 0
    %759 = vmatpush1.bf16.xpose.msra.mxu0 0
    %760 = vmatprep.subr.bf16.mxu0 0
    %761 = vmatpush1.bf16.xpose.msra.mxu0 0
    %762 = vmatprep.subr.bf16.mxu0 0
    %763 = vmatpush1.bf16.xpose.msra.mxu0 0
    %764 = vmatprep.subr.bf16.mxu0 0
    %765 = vmatpush1.bf16.xpose.msra.mxu0 %v750
    %766 = vmatprep.subr.bf16.mxu0 0
    %767 = vmatpush1.bf16.xpose.msra.mxu0 %v747
    %768 = vmatprep.subr.bf16.mxu0 0
    %769 = vmatpush2.bf16.xpose.msra.mxu0 0
    %770 = vmatprep.subr.bf16.mxu0 0
    %771 = vmatpush2.bf16.xpose.msra.mxu0 0
    %772 = vmatprep.subr.bf16.mxu0 0
    %773 = vmatpush2.bf16.xpose.msra.mxu0 0
    %774 = vmatprep.subr.bf16.mxu0 0
    %775 = vmatpush2.bf16.xpose.msra.mxu0 0
    %776 = vmatprep.subr.bf16.mxu0 0
    %777 = vmatpush2.bf16.xpose.msra.mxu0 0
    %778 = vmatprep.subr.bf16.mxu0 0
    %779 = vmatpush2.bf16.xpose.msra.mxu0 0
    %780 = vmatprep.subr.bf16.mxu0 0
    %781 = vmatpush2.bf16.xpose.msra.mxu0 0
    %782 = vmatprep.subr.bf16.mxu0 0
    %783 = vmatpush2.bf16.xpose.msra.mxu0 0
    %784 = vmatprep.mubr.bf16.mxu0 0
    %785 = vmatmul.mubr.bf16.gmra.mxu0 %v735
    %v786 = vpop.f32.mrf.mxu0
    %v787 = vadd.f32 0.0, %v786
    %v788 = vpop.f32.mrf.mxu0
    %v789 = vpop.f32.mrf.mxu0
    %v790 = vadd.f32 0.0, %v789
    %v791 = vpop.f32.mrf.mxu0
    %792 = vmatprep.mubr.bf16.mxu0 0
    %793 = vmatmul.mubr.bf16.gmra.mxu0 %v738
    %v794 = vpop.f32.mrf.mxu0
    %v795 = vadd.f32 0.0, %v794
    %v796 = vpop.f32.mrf.mxu0
    %v797 = vpop.f32.mrf.mxu0
    %v798 = vadd.f32 0.0, %v797
    %v799 = vpop.f32.mrf.mxu0
    %800 = vmatprep.mubr.bf16.mxu0 0
    %801 = vmatmul.mubr.bf16.gmra.mxu0 %v741
    %v802 = vpop.f32.mrf.mxu0
    %v803 = vadd.f32 0.0, %v802
    %v804 = vpop.f32.mrf.mxu0
    %v805 = vpop.f32.mrf.mxu0
    %v806 = vadd.f32 0.0, %v805
    %v807 = vpop.f32.mrf.mxu0
    %808 = vmatprep.mubr.bf16.mxu0 0
    %809 = vmatmul.mubr.bf16.gmra.mxu0 %v744
    %v810 = vpop.f32.mrf.mxu0
    %v811 = vadd.f32 0.0, %v810
    %v812 = vpop.f32.mrf.mxu0
    %v813 = vpop.f32.mrf.mxu0
    %v814 = vadd.f32 0.0, %v813
    %v815 = vpop.f32.mrf.mxu0
    %816 = vdwg.mxu0
    %825 = vrot.lane.b32.xlu0 %v147, 96
    %v826 = vpop.permute.xlu0 %825
    %827 = vrot.lane.b32.xlu0 %v150, 96
    %v828 = vpop.permute.xlu0 %827
    %829 = vrot.lane.b32.xlu0 %v155, 96
    %v830 = vpop.permute.xlu0 %829
    %831 = vrot.lane.b32.xlu0 %v158, 96
    %v832 = vpop.permute.xlu0 %831
    %833 = vrot.lane.b32.xlu0 %v163, 96
    %v834 = vpop.permute.xlu0 %833
    %835 = vrot.lane.b32.xlu0 %v166, 96
    %v836 = vpop.permute.xlu0 %835
    %837 = vrot.lane.b32.xlu0 %v171, 96
    %v838 = vpop.permute.xlu0 %837
    %839 = vrot.lane.b32.xlu0 %v174, 96
    %v840 = vpop.permute.xlu0 %839
    %v849 = vmul.f32 %v787, %v826
    %v850 = vmul.f32 %v790, %v828
    %v851 = vmul.f32 %v795, %v830
    %v852 = vmul.f32 %v798, %v832
    %v853 = vmul.f32 %v803, %v834
    %v854 = vmul.f32 %v806, %v836
    %v855 = vmul.f32 %v811, %v838
    %v856 = vmul.f32 %v814, %v840
    %v857 = vsel %vm99, %v849, 0.0
    %v858 = vrot.slane %v857, 4
    %v859 = vadd.f32 %v857, %v858
    %v860 = vrot.slane %v859, 2
    %v861 = vadd.f32 %v859, %v860
    %v862 = vrot.slane %v861, 1
    %v863 = vadd.f32 %v861, %v862
    %v864 = vsel %vm99, %v850, 0.0
    %v865 = vrot.slane %v864, 4
    %v866 = vadd.f32 %v864, %v865
    %v867 = vrot.slane %v866, 2
    %v868 = vadd.f32 %v866, %v867
    %v869 = vrot.slane %v868, 1
    %v870 = vadd.f32 %v868, %v869
    %v871 = vsel %vm99, %v851, 0.0
    %v872 = vrot.slane %v871, 4
    %v873 = vadd.f32 %v871, %v872
    %v874 = vrot.slane %v873, 2
    %v875 = vadd.f32 %v873, %v874
    %v876 = vrot.slane %v875, 1
    %v877 = vadd.f32 %v875, %v876
    %v878 = vsel %vm99, %v852, 0.0
    %v879 = vrot.slane %v878, 4
    %v880 = vadd.f32 %v878, %v879
    %v881 = vrot.slane %v880, 2
    %v882 = vadd.f32 %v880, %v881
    %v883 = vrot.slane %v882, 1
    %v884 = vadd.f32 %v882, %v883
    %v885 = vsel %vm99, %v853, 0.0
    %v886 = vrot.slane %v885, 4
    %v887 = vadd.f32 %v885, %v886
    %v888 = vrot.slane %v887, 2
    %v889 = vadd.f32 %v887, %v888
    %v890 = vrot.slane %v889, 1
    %v891 = vadd.f32 %v889, %v890
    %v892 = vsel %vm99, %v854, 0.0
    %v893 = vrot.slane %v892, 4
    %v894 = vadd.f32 %v892, %v893
    %v895 = vrot.slane %v894, 2
    %v896 = vadd.f32 %v894, %v895
    %v897 = vrot.slane %v896, 1
    %v898 = vadd.f32 %v896, %v897
    %v899 = vsel %vm99, %v855, 0.0
    %v900 = vrot.slane %v899, 4
    %v901 = vadd.f32 %v899, %v900
    %v902 = vrot.slane %v901, 2
    %v903 = vadd.f32 %v901, %v902
    %v904 = vrot.slane %v903, 1
    %v905 = vadd.f32 %v903, %v904
    %v906 = vsel %vm99, %v856, 0.0
    %v907 = vrot.slane %v906, 4
    %v908 = vadd.f32 %v906, %v907
    %v909 = vrot.slane %v908, 2
    %v910 = vadd.f32 %v908, %v909
    %v911 = vrot.slane %v910, 1
    %v912 = vadd.f32 %v910, %v911
    %v913 = vpack.c.bf16 %v863, %v863
    %v914 = vpack.c.bf16 %v870, %v870
    %v915 = vpack.c.bf16 %v877, %v877
    %v916 = vpack.c.bf16 %v884, %v884
    %v917 = vpack.c.bf16 %v891, %v891
    %v918 = vpack.c.bf16 %v898, %v898
    %v919 = vpack.c.bf16 %v905, %v905
    %v920 = vpack.c.bf16 %v912, %v912
    %v921 = vld [vmem:[%s5] sm:$0xf]
    %v922 = vld [vmem:[%s5 + $0x4] sm:$0xf]
    %v923 = vld [vmem:[%s5 + $0x8] sm:$0xf]
    %v924 = vld [vmem:[%s5 + $0xc] sm:$0xf]
    %v925 = vlaneseq
    %v926 = vshrl.u32 %v925, 7
    %v927 = vsub.s32 0, %v926
    %v928 = vrot.slane %v44, %v927
    %v937 = vunpack.c.l.b16 %v913
    %v938 = vunpack.c.l.b16 %v914
    %v939 = vunpack.c.l.b16 %v915
    %v940 = vunpack.c.l.b16 %v916
    %v941 = vunpack.c.l.b16 %v917
    %v942 = vunpack.c.l.b16 %v918
    %v943 = vunpack.c.l.b16 %v919
    %v944 = vunpack.c.l.b16 %v920
    %v945 = vsel %vm203, %v938, %v937
    %v946 = vsel %vm206, %v939, %v945
    %v947 = vsel %vm209, %v940, %v946
    %v948 = vsel %vm212, %v941, %v947
    %v949 = vsel %vm215, %v942, %v948
    %v950 = vsel %vm218, %v943, %v949
    %v951 = vsel %vm220, %v944, %v950
    %v952 = vpack.c.b16 %v951, %v951
    %v957 = vunpack.c.l.b16 %v921
    %v958 = vunpack.c.l.b16 %v922
    %v959 = vunpack.c.l.b16 %v923
    %v960 = vunpack.c.l.b16 %v924
    %v961 = vpack.c.b16 %v958, %v957
    %v962 = vpack.c.b16 %v960, %v959
    %v966 = vsel %vm99, %v952, 0
    %968 = vmatprep.subr.bf16.mxu0 0
    %969 = vmatpush1.bf16.msra.mxu0 0
    %970 = vmatprep.subr.bf16.mxu0 0
    %971 = vmatpush1.bf16.msra.mxu0 0
    %972 = vmatprep.subr.bf16.mxu0 0
    %973 = vmatpush1.bf16.msra.mxu0 0
    %974 = vmatprep.subr.bf16.mxu0 0
    %975 = vmatpush1.bf16.msra.mxu0 0
    %976 = vmatprep.subr.bf16.mxu0 0
    %977 = vmatpush1.bf16.msra.mxu0 0
    %978 = vmatprep.subr.bf16.mxu0 0
    %979 = vmatpush1.bf16.msra.mxu0 0
    %980 = vmatprep.subr.bf16.mxu0 0
    %981 = vmatpush1.bf16.msra.mxu0 %v962
    %982 = vmatprep.subr.bf16.mxu0 0
    %983 = vmatpush1.bf16.msra.mxu0 %v961
    %984 = vmatprep.subr.bf16.mxu0 0
    %985 = vmatpush2.bf16.msra.mxu0 0
    %986 = vmatprep.subr.bf16.mxu0 0
    %987 = vmatpush2.bf16.msra.mxu0 0
    %988 = vmatprep.subr.bf16.mxu0 0
    %989 = vmatpush2.bf16.msra.mxu0 0
    %990 = vmatprep.subr.bf16.mxu0 0
    %991 = vmatpush2.bf16.msra.mxu0 0
    %992 = vmatprep.subr.bf16.mxu0 0
    %993 = vmatpush2.bf16.msra.mxu0 0
    %994 = vmatprep.subr.bf16.mxu0 0
    %995 = vmatpush2.bf16.msra.mxu0 0
    %996 = vmatprep.subr.bf16.mxu0 0
    %997 = vmatpush2.bf16.msra.mxu0 0
    %998 = vmatprep.subr.bf16.mxu0 0
    %999 = vmatpush2.bf16.msra.mxu0 0
    %1000 = vmatprep.mubr.bf16.mxu0 0
    %1001 = vmatmul.mubr.bf16.gmra.mxu0 %v966
    %v1002 = vpop.f32.mrf.mxu0
    %v1003 = vadd.f32 %v928, %v1002
    %v1004 = vpop.f32.mrf.mxu0
    %v1005 = vpop.f32.mrf.mxu0
    %v1006 = vpop.f32.mrf.mxu0
    %1007 = vdwg.mxu0
    %v1009 = vrot.slane %v1003, 1
    %v1010 = vrot.slane %v1003, 2
    %v1011 = vrot.slane %v1003, 3
    %v1012 = vrot.slane %v1003, 4
    %v1013 = vrot.slane %v1003, 5
    %v1014 = vrot.slane %v1003, 6
    %v1015 = vrot.slane %v1003, 7
    %v1024 = vadd.f32 %v51, %v1009
    %v1025 = vadd.f32 %v52, %v1010
    %v1026 = vadd.f32 %v53, %v1011
    %v1027 = vadd.f32 %v54, %v1012
    %v1028 = vadd.f32 %v55, %v1013
    %v1029 = vadd.f32 %v56, %v1014
    %v1030 = vadd.f32 %v57, %v1015
    %v1031 = vadd.f32 %v58, %v1003
    %v1040 = vrot.slane %v1025, 7
    %v1041 = vrot.slane %v1026, 6
    %v1042 = vsel %vm203, %v1041, %v1040
    %v1043 = vrot.slane %v1027, 5
    %v1044 = vsel %vm206, %v1043, %v1042
    %v1045 = vrot.slane %v1028, 4
    %v1046 = vsel %vm209, %v1045, %v1044
    %v1047 = vrot.slane %v1029, 3
    %v1048 = vsel %vm212, %v1047, %v1046
    %v1049 = vrot.slane %v1030, 2
    %v1050 = vsel %vm215, %v1049, %v1048
    %v1051 = vrot.slane %v1031, 1
    %v1052 = vsel %vm218, %v1051, %v1050
    %vm1055 = vcmask 261127
    %v1056 = vsel %vm1055, %v1024, 0.0
    %1057 = vadd.xlane.f32.xlu0 %v1056
    %v1058 = vpop.xlane.xlu0 %1057
    %vm1059 = vcmask 260096
    %v1060 = vsel %vm1059, %v1052, 0.0
    %1061 = vadd.xlane.f32.xlu0 %v1060
    %v1062 = vpop.xlane.xlu0 %1061
    %v1063 = vrcp.pop 32.0
    %v1064 = vmul.f32 %v1058, %v1063
    %v1065 = vmul.f32 %v1062, %v1063
    %v1068 = vrot.slane %v1065, 1
    %v1069 = vrot.slane %v1065, 2
    %v1070 = vrot.slane %v1065, 3
    %v1071 = vrot.slane %v1065, 4
    %v1072 = vrot.slane %v1065, 5
    %v1073 = vrot.slane %v1065, 6
    %v1074 = vrot.slane %v1065, 7
    %v1083 = vsub.f32 %v1024, %v1064
    %v1084 = vsub.f32 %v1025, %v1068
    %v1085 = vsub.f32 %v1026, %v1069
    %v1086 = vsub.f32 %v1027, %v1070
    %v1087 = vsub.f32 %v1028, %v1071
    %v1088 = vsub.f32 %v1029, %v1072
    %v1089 = vsub.f32 %v1030, %v1073
    %v1090 = vsub.f32 %v1031, %v1074
    %v1091 = vmul.f32 %v1083, %v1083
    %v1092 = vmul.f32 %v1084, %v1084
    %v1093 = vmul.f32 %v1085, %v1085
    %v1094 = vmul.f32 %v1086, %v1086
    %v1095 = vmul.f32 %v1087, %v1087
    %v1096 = vmul.f32 %v1088, %v1088
    %v1097 = vmul.f32 %v1089, %v1089
    %v1098 = vmul.f32 %v1090, %v1090
    %v1107 = vrot.slane %v1092, 7
    %v1108 = vrot.slane %v1093, 6
    %v1109 = vsel %vm203, %v1108, %v1107
    %v1110 = vrot.slane %v1094, 5
    %v1111 = vsel %vm206, %v1110, %v1109
    %v1112 = vrot.slane %v1095, 4
    %v1113 = vsel %vm209, %v1112, %v1111
    %v1114 = vrot.slane %v1096, 3
    %v1115 = vsel %vm212, %v1114, %v1113
    %v1116 = vrot.slane %v1097, 2
    %v1117 = vsel %vm215, %v1116, %v1115
    %v1118 = vrot.slane %v1098, 1
    %v1119 = vsel %vm218, %v1118, %v1117
    %v1122 = vsel %vm1055, %v1091, 0.0
    %1123 = vadd.xlane.f32.xlu0 %v1122
    %v1124 = vpop.xlane.xlu0 %1123
    %v1125 = vsel %vm1059, %v1119, 0.0
    %1126 = vadd.xlane.f32.xlu0 %v1125
    %v1127 = vpop.xlane.xlu0 %1126
    %v1128 = vmul.f32 %v1124, %v1063
    %v1129 = vmul.f32 %v1127, %v1063
    %v1130 = vadd.f32 %v1128, 1e-05
    %v1131 = vadd.f32 %v1129, 1e-05
    %v1132 = vrsqrt.pop %v1130
    %v1133 = vrsqrt.pop %v1131
    %v1136 = vrot.slane %v1133, 1
    %v1137 = vrot.slane %v1133, 2
    %v1138 = vrot.slane %v1133, 3
    %v1139 = vrot.slane %v1133, 4
    %v1140 = vrot.slane %v1133, 5
    %v1141 = vrot.slane %v1133, 6
    %v1142 = vrot.slane %v1133, 7
    %v1151 = vmul.f32 %v1083, %v1132
    %v1152 = vmul.f32 %v1084, %v1136
    %v1153 = vmul.f32 %v1085, %v1137
    %v1154 = vmul.f32 %v1086, %v1138
    %v1155 = vmul.f32 %v1087, %v1139
    %v1156 = vmul.f32 %v1088, %v1140
    %v1157 = vmul.f32 %v1089, %v1141
    %v1158 = vmul.f32 %v1090, %v1142
    %v1159 = vlaneseq
    %v1160 = vshrl.u32 %v1159, 7
    %v1161 = vsub.s32 0, %v1160
    %v1162 = vrot.slane %v47, %v1161
    %v1163 = vmul.f32 %v1151, %v1162
    %v1164 = vmul.f32 %v1152, %v1162
    %v1165 = vmul.f32 %v1153, %v1162
    %v1166 = vmul.f32 %v1154, %v1162
    %v1167 = vmul.f32 %v1155, %v1162
    %v1168 = vmul.f32 %v1156, %v1162
    %v1169 = vmul.f32 %v1157, %v1162
    %v1170 = vmul.f32 %v1158, %v1162
    %v1171 = vlaneseq
    %v1172 = vshrl.u32 %v1171, 7
    %v1173 = vsub.s32 0, %v1172
    %v1174 = vrot.slane %v48, %v1173
    %v1175 = vadd.f32 %v1163, %v1174
    %v1176 = vadd.f32 %v1164, %v1174
    %v1177 = vadd.f32 %v1165, %v1174
    %v1178 = vadd.f32 %v1166, %v1174
    %v1179 = vadd.f32 %v1167, %v1174
    %v1180 = vadd.f32 %v1168, %v1174
    %v1181 = vadd.f32 %v1169, %v1174
    %v1182 = vadd.f32 %v1170, %v1174
    %v1183 = vpack.c.bf16 %v1175, %v1175
    %v1184 = vpack.c.bf16 %v1176, %v1176
    %v1185 = vpack.c.bf16 %v1177, %v1177
    %v1186 = vpack.c.bf16 %v1178, %v1178
    %v1187 = vpack.c.bf16 %v1179, %v1179
    %v1188 = vpack.c.bf16 %v1180, %v1180
    %v1189 = vpack.c.bf16 %v1181, %v1181
    %v1190 = vpack.c.bf16 %v1182, %v1182
    %v1191 = vld [vmem:[%s6] sm:$0xf]
    %v1192 = vld [vmem:[%s6 + $0x4] sm:$0xf]
    %v1193 = vld [vmem:[%s6 + $0x8] sm:$0xf]
    %v1194 = vld [vmem:[%s6 + $0xc] sm:$0xf]
    %v1195 = vlaneseq
    %v1196 = vshrl.u32 %v1195, 7
    %v1197 = vsub.s32 0, %v1196
    %v1198 = vrot.slane %v45, %v1197
    %v1207 = vunpack.c.l.b16 %v1183
    %v1208 = vunpack.c.l.b16 %v1184
    %v1209 = vunpack.c.l.b16 %v1185
    %v1210 = vunpack.c.l.b16 %v1186
    %v1211 = vunpack.c.l.b16 %v1187
    %v1212 = vunpack.c.l.b16 %v1188
    %v1213 = vunpack.c.l.b16 %v1189
    %v1214 = vunpack.c.l.b16 %v1190
    %v1215 = vrot.slane %v1207, 7
    %v1216 = vrot.slane %v1208, 6
    %v1217 = vsel %vm203, %v1216, %v1215
    %v1218 = vrot.slane %v1209, 5
    %v1219 = vsel %vm206, %v1218, %v1217
    %v1220 = vrot.slane %v1210, 4
    %v1221 = vsel %vm209, %v1220, %v1219
    %v1222 = vrot.slane %v1211, 3
    %v1223 = vsel %vm212, %v1222, %v1221
    %v1224 = vrot.slane %v1212, 2
    %v1225 = vsel %vm215, %v1224, %v1223
    %v1226 = vrot.slane %v1213, 1
    %v1227 = vsel %vm218, %v1226, %v1225
    %v1228 = vsel %vm220, %v1214, %v1227
    %v1229 = vpack.c.b16 %v1228, %v1228
    %v1234 = vunpack.c.l.b16 %v1191
    %v1235 = vunpack.c.l.b16 %v1192
    %v1236 = vunpack.c.l.b16 %v1193
    %v1237 = vunpack.c.l.b16 %v1194
    %v1238 = vpack.c.b16 %v1235, %v1234
    %v1239 = vpack.c.b16 %v1237, %v1236
    %v1243 = vsel %vm99, %v1229, 0
    %1245 = vmatprep.subr.bf16.mxu0 0
    %1246 = vmatpush1.bf16.msra.mxu0 0
    %1247 = vmatprep.subr.bf16.mxu0 0
    %1248 = vmatpush1.bf16.msra.mxu0 0
    %1249 = vmatprep.subr.bf16.mxu0 0
    %1250 = vmatpush1.bf16.msra.mxu0 0
    %1251 = vmatprep.subr.bf16.mxu0 0
    %1252 = vmatpush1.bf16.msra.mxu0 0
    %1253 = vmatprep.subr.bf16.mxu0 0
    %1254 = vmatpush1.bf16.msra.mxu0 0
    %1255 = vmatprep.subr.bf16.mxu0 0
    %1256 = vmatpush1.bf16.msra.mxu0 0
    %1257 = vmatprep.subr.bf16.mxu0 0
    %1258 = vmatpush1.bf16.msra.mxu0 %v1239
    %1259 = vmatprep.subr.bf16.mxu0 0
    %1260 = vmatpush1.bf16.msra.mxu0 %v1238
    %1261 = vmatprep.subr.bf16.mxu0 0
    %1262 = vmatpush2.bf16.msra.mxu0 0
    %1263 = vmatprep.subr.bf16.mxu0 0
    %1264 = vmatpush2.bf16.msra.mxu0 0
    %1265 = vmatprep.subr.bf16.mxu0 0
    %1266 = vmatpush2.bf16.msra.mxu0 0
    %1267 = vmatprep.subr.bf16.mxu0 0
    %1268 = vmatpush2.bf16.msra.mxu0 0
    %1269 = vmatprep.subr.bf16.mxu0 0
    %1270 = vmatpush2.bf16.msra.mxu0 0
    %1271 = vmatprep.subr.bf16.mxu0 0
    %1272 = vmatpush2.bf16.msra.mxu0 0
    %1273 = vmatprep.subr.bf16.mxu0 0
    %1274 = vmatpush2.bf16.msra.mxu0 0
    %1275 = vmatprep.subr.bf16.mxu0 0
    %1276 = vmatpush2.bf16.msra.mxu0 0
    %1277 = vmatprep.mubr.bf16.mxu0 0
    %1278 = vmatmul.mubr.bf16.gmra.mxu0 %v1243
    %v1279 = vpop.f32.mrf.mxu0
    %v1280 = vadd.f32 %v1198, %v1279
    %v1281 = vpop.f32.mrf.mxu0
    %v1282 = vpop.f32.mrf.mxu0
    %v1283 = vpop.f32.mrf.mxu0
    %1284 = vdwg.mxu0
    %v1285 = vmax.f32 %v1280, 0.0
    %v1286 = vpack.c.bf16 %v1285, %v1285
    %v1287 = vld [vmem:[%s7] sm:$0xf]
    %v1288 = vld [vmem:[%s7 + $0x4] sm:$0xf]
    %v1289 = vld [vmem:[%s7 + $0x8] sm:$0xf]
    %v1290 = vld [vmem:[%s7 + $0xc] sm:$0xf]
    %v1291 = vld [vmem:[%s7 + $0x10] sm:$0xf]
    %v1292 = vld [vmem:[%s7 + $0x14] sm:$0xf]
    %v1293 = vld [vmem:[%s7 + $0x18] sm:$0xf]
    %v1294 = vld [vmem:[%s7 + $0x1c] sm:$0xf]
    %v1295 = vlaneseq
    %v1296 = vshrl.u32 %v1295, 7
    %v1297 = vsub.s32 0, %v1296
    %v1298 = vrot.slane %v46, %v1297
    %v1307 = vunpack.c.l.b16 %v1287
    %v1308 = vunpack.c.l.b16 %v1288
    %v1309 = vunpack.c.l.b16 %v1289
    %v1310 = vunpack.c.l.b16 %v1290
    %v1311 = vunpack.c.l.b16 %v1291
    %v1312 = vunpack.c.l.b16 %v1292
    %v1313 = vunpack.c.l.b16 %v1293
    %v1314 = vunpack.c.l.b16 %v1294
    %v1315 = vpack.c.b16 %v1308, %v1307
    %v1316 = vpack.c.b16 %v1310, %v1309
    %v1317 = vpack.c.b16 %v1312, %v1311
    %v1318 = vpack.c.b16 %v1314, %v1313
    %vm1323 = vcmask 523264
    %v1325 = vsel %vm1323, %v1286, 0
    %1327 = vmatprep.subr.bf16.mxu0 0
    %1328 = vmatpush1.bf16.msra.mxu0 0
    %1329 = vmatprep.subr.bf16.mxu0 0
    %1330 = vmatpush1.bf16.msra.mxu0 0
    %1331 = vmatprep.subr.bf16.mxu0 0
    %1332 = vmatpush1.bf16.msra.mxu0 0
    %1333 = vmatprep.subr.bf16.mxu0 0
    %1334 = vmatpush1.bf16.msra.mxu0 0
    %1335 = vmatprep.subr.bf16.mxu0 0
    %1336 = vmatpush1.bf16.msra.mxu0 %v1318
    %1337 = vmatprep.subr.bf16.mxu0 0
    %1338 = vmatpush1.bf16.msra.mxu0 %v1317
    %1339 = vmatprep.subr.bf16.mxu0 0
    %1340 = vmatpush1.bf16.msra.mxu0 %v1316
    %1341 = vmatprep.subr.bf16.mxu0 0
    %1342 = vmatpush1.bf16.msra.mxu0 %v1315
    %1343 = vmatprep.subr.bf16.mxu0 0
    %1344 = vmatpush2.bf16.msra.mxu0 0
    %1345 = vmatprep.subr.bf16.mxu0 0
    %1346 = vmatpush2.bf16.msra.mxu0 0
    %1347 = vmatprep.subr.bf16.mxu0 0
    %1348 = vmatpush2.bf16.msra.mxu0 0
    %1349 = vmatprep.subr.bf16.mxu0 0
    %1350 = vmatpush2.bf16.msra.mxu0 0
    %1351 = vmatprep.subr.bf16.mxu0 0
    %1352 = vmatpush2.bf16.msra.mxu0 0
    %1353 = vmatprep.subr.bf16.mxu0 0
    %1354 = vmatpush2.bf16.msra.mxu0 0
    %1355 = vmatprep.subr.bf16.mxu0 0
    %1356 = vmatpush2.bf16.msra.mxu0 0
    %1357 = vmatprep.subr.bf16.mxu0 0
    %1358 = vmatpush2.bf16.msra.mxu0 0
    %1359 = vmatprep.mubr.bf16.mxu0 0
    %1360 = vmatmul.mubr.bf16.gmra.mxu0 %v1325
    %v1361 = vpop.f32.mrf.mxu0
    %v1362 = vadd.f32 %v1298, %v1361
    %v1363 = vpop.f32.mrf.mxu0
    %v1364 = vpop.f32.mrf.mxu0
    %v1365 = vpop.f32.mrf.mxu0
    %1366 = vdwg.mxu0
    %v1368 = vrot.slane %v1362, 1
    %v1369 = vrot.slane %v1362, 2
    %v1370 = vrot.slane %v1362, 3
    %v1371 = vrot.slane %v1362, 4
    %v1372 = vrot.slane %v1362, 5
    %v1373 = vrot.slane %v1362, 6
    %v1374 = vrot.slane %v1362, 7
    %v1383 = vadd.f32 %v1175, %v1368
    %v1384 = vadd.f32 %v1176, %v1369
    %v1385 = vadd.f32 %v1177, %v1370
    %v1386 = vadd.f32 %v1178, %v1371
    %v1387 = vadd.f32 %v1179, %v1372
    %v1388 = vadd.f32 %v1180, %v1373
    %v1389 = vadd.f32 %v1181, %v1374
    %v1390 = vadd.f32 %v1182, %v1362
    %v1399 = vrot.slane %v1384, 7
    %v1400 = vrot.slane %v1385, 6
    %v1401 = vsel %vm203, %v1400, %v1399
    %v1402 = vrot.slane %v1386, 5
    %v1403 = vsel %vm206, %v1402, %v1401
    %v1404 = vrot.slane %v1387, 4
    %v1405 = vsel %vm209, %v1404, %v1403
    %v1406 = vrot.slane %v1388, 3
    %v1407 = vsel %vm212, %v1406, %v1405
    %v1408 = vrot.slane %v1389, 2
    %v1409 = vsel %vm215, %v1408, %v1407
    %v1410 = vrot.slane %v1390, 1
    %v1411 = vsel %vm218, %v1410, %v1409
    %v1414 = vsel %vm1055, %v1383, 0.0
    %1415 = vadd.xlane.f32.xlu0 %v1414
    %v1416 = vpop.xlane.xlu0 %1415
    %v1417 = vsel %vm1059, %v1411, 0.0
    %1418 = vadd.xlane.f32.xlu0 %v1417
    %v1419 = vpop.xlane.xlu0 %1418
    %v1420 = vmul.f32 %v1416, %v1063
    %v1421 = vmul.f32 %v1419, %v1063
    %v1424 = vrot.slane %v1421, 1
    %v1425 = vrot.slane %v1421, 2
    %v1426 = vrot.slane %v1421, 3
    %v1427 = vrot.slane %v1421, 4
    %v1428 = vrot.slane %v1421, 5
    %v1429 = vrot.slane %v1421, 6
    %v1430 = vrot.slane %v1421, 7
    %v1439 = vsub.f32 %v1383, %v1420
    %v1440 = vsub.f32 %v1384, %v1424
    %v1441 = vsub.f32 %v1385, %v1425
    %v1442 = vsub.f32 %v1386, %v1426
    %v1443 = vsub.f32 %v1387, %v1427
    %v1444 = vsub.f32 %v1388, %v1428
    %v1445 = vsub.f32 %v1389, %v1429
    %v1446 = vsub.f32 %v1390, %v1430
    %v1447 = vmul.f32 %v1439, %v1439
    %v1448 = vmul.f32 %v1440, %v1440
    %v1449 = vmul.f32 %v1441, %v1441
    %v1450 = vmul.f32 %v1442, %v1442
    %v1451 = vmul.f32 %v1443, %v1443
    %v1452 = vmul.f32 %v1444, %v1444
    %v1453 = vmul.f32 %v1445, %v1445
    %v1454 = vmul.f32 %v1446, %v1446
    %v1463 = vrot.slane %v1448, 7
    %v1464 = vrot.slane %v1449, 6
    %v1465 = vsel %vm203, %v1464, %v1463
    %v1466 = vrot.slane %v1450, 5
    %v1467 = vsel %vm206, %v1466, %v1465
    %v1468 = vrot.slane %v1451, 4
    %v1469 = vsel %vm209, %v1468, %v1467
    %v1470 = vrot.slane %v1452, 3
    %v1471 = vsel %vm212, %v1470, %v1469
    %v1472 = vrot.slane %v1453, 2
    %v1473 = vsel %vm215, %v1472, %v1471
    %v1474 = vrot.slane %v1454, 1
    %v1475 = vsel %vm218, %v1474, %v1473
    %v1478 = vsel %vm1055, %v1447, 0.0
    %1479 = vadd.xlane.f32.xlu0 %v1478
    %v1480 = vpop.xlane.xlu0 %1479
    %v1481 = vsel %vm1059, %v1475, 0.0
    %1482 = vadd.xlane.f32.xlu0 %v1481
    %v1483 = vpop.xlane.xlu0 %1482
    %v1484 = vmul.f32 %v1480, %v1063
    %v1485 = vmul.f32 %v1483, %v1063
    %v1486 = vadd.f32 %v1484, 1e-05
    %v1487 = vadd.f32 %v1485, 1e-05
    %v1488 = vrsqrt.pop %v1486
    %v1489 = vrsqrt.pop %v1487
    %v1492 = vrot.slane %v1489, 1
    %v1493 = vrot.slane %v1489, 2
    %v1494 = vrot.slane %v1489, 3
    %v1495 = vrot.slane %v1489, 4
    %v1496 = vrot.slane %v1489, 5
    %v1497 = vrot.slane %v1489, 6
    %v1498 = vrot.slane %v1489, 7
    %v1507 = vmul.f32 %v1439, %v1488
    %v1508 = vmul.f32 %v1440, %v1492
    %v1509 = vmul.f32 %v1441, %v1493
    %v1510 = vmul.f32 %v1442, %v1494
    %v1511 = vmul.f32 %v1443, %v1495
    %v1512 = vmul.f32 %v1444, %v1496
    %v1513 = vmul.f32 %v1445, %v1497
    %v1514 = vmul.f32 %v1446, %v1498
    %v1515 = vlaneseq
    %v1516 = vshrl.u32 %v1515, 7
    %v1517 = vsub.s32 0, %v1516
    %v1518 = vrot.slane %v49, %v1517
    %v1519 = vmul.f32 %v1507, %v1518
    %v1520 = vmul.f32 %v1508, %v1518
    %v1521 = vmul.f32 %v1509, %v1518
    %v1522 = vmul.f32 %v1510, %v1518
    %v1523 = vmul.f32 %v1511, %v1518
    %v1524 = vmul.f32 %v1512, %v1518
    %v1525 = vmul.f32 %v1513, %v1518
    %v1526 = vmul.f32 %v1514, %v1518
    %v1527 = vlaneseq
    %v1528 = vshrl.u32 %v1527, 7
    %v1529 = vsub.s32 0, %v1528
    %v1530 = vrot.slane %v50, %v1529
    %v1531 = vadd.f32 %v1519, %v1530
    %v1532 = vadd.f32 %v1520, %v1530
    %v1533 = vadd.f32 %v1521, %v1530
    %v1534 = vadd.f32 %v1522, %v1530
    %v1535 = vadd.f32 %v1523, %v1530
    %v1536 = vadd.f32 %v1524, %v1530
    %v1537 = vadd.f32 %v1525, %v1530
    %v1538 = vadd.f32 %v1526, %v1530
    %v1547 = vrot.slane %v1532, 7
    %v1548 = vrot.slane %v1533, 6
    %v1549 = vsel %vm203, %v1548, %v1547
    %v1550 = vrot.slane %v1534, 5
    %v1551 = vsel %vm206, %v1550, %v1549
    %v1552 = vrot.slane %v1535, 4
    %v1553 = vsel %vm209, %v1552, %v1551
    %v1554 = vrot.slane %v1536, 3
    %v1555 = vsel %vm212, %v1554, %v1553
    %v1556 = vrot.slane %v1537, 2
    %v1557 = vsel %vm215, %v1556, %v1555
    %v1558 = vrot.slane %v1538, 1
    %v1559 = vsel %vm218, %v1558, %v1557
    %1562 = vst.msk [vmem:[#allocation2 - $0x7] sm:$0x80] %vm1055, %v1531
    %1563 = vst.msk [vmem:[#allocation2 + $0x1] sm:$0x7f] %vm1059, %v1559
    // Predicated region
    $region38: #{tpu_custom_call.1} parent=1 // pred_check
      _
    $region39: #{tpu_custom_call.1} parent=1 // pred_check_branch
      %1565 = sbr.rel (0) target = $region41
    $region40: #{tpu_custom_call.1} parent=1 // pred_region
      %s1567 = ssub.s32 128, 128
      %1568 = vsyncadd [#allocation3], %s1567
      %s1570 = sshll.u32 [#allocation2], 4
      %s1571 = int_to_ptr.vmem [resolvable:$true] %s1570
      %1573 = dma.vmem_to_hbm [thread:$0]  %s1571, 128, %s9, [#allocation3]
    $region41: #{tpu_custom_call.1} parent=1 // pred_fallthru
      _
    // Predicated region
    $region42: #{tpu_custom_call.1} parent=1 // pred_check
      _
    $region43: #{tpu_custom_call.1} parent=1 // pred_check_branch
      %1575 = sbr.rel (0) target = $region45
    $region44: #{tpu_custom_call.1} parent=1 // pred_region
      %1576 = dma.done [#allocation3], 128
    $region45: #{tpu_custom_call.1} parent=1 // pred_fallthru
      _
    %1577 = vsyncpa [#allocation3], 1

</llo_original>
